<compile_context>
chip_gen: v7x
topology: tpu7x:2x2x1
jax: 0.10.0
libtpu: 0.0.40
codegen_flags: <defaults>
</compile_context>

<pallas_src>
import jax
import jax.numpy as jnp
from jax.experimental import pallas as pl
from jax.experimental.pallas import tpu as pltpu

# ----------------------------- configuration --------------------------------
B = 2            # batch
S = 8            # seq_len
D_MODEL = 32     # d_model
NUM_HEADS = 4
HEAD_DIM = D_MODEL // NUM_HEADS
FF_HIDDEN = 64
LN_EPS = 1e-5
BS = B * S       # tokens processed per kernel invocation
LANE_TILE = 128  # Q/K/V each occupy their own 128-lane tile in the packed weight
NEG_INF = -1e30


# ------------------------------- kernel -------------------------------------
def encoder_block_kernel(x_ref, wqkv_ref, wmats_ref, vec_ref, mask_ref, o_ref):
    D, F, H, Dh = D_MODEL, FF_HIDDEN, NUM_HEADS, HEAD_DIM

    x = x_ref[...]                                   # (BS, D) f32, all tokens

    # ---- unpack the packed per-channel vectors (one input instead of 10) ----
    vec = vec_ref[...]                               # (8, 3*128)
    b_qkv = vec[0:1, :]                              # (1, 384); Q part pre-scaled
    b_o = vec[1:2, :D]
    b_1 = vec[2:3, :F]
    b_2 = vec[3:4, :D]
    g1, be1 = vec[4:5, :D], vec[5:6, :D]
    g2, be2 = vec[6:7, :D], vec[7:8, :D]

    # ---- unpack Wo / W1 / W2 from the packed weight block ----
    w_o = wmats_ref[0:D, 0:D]                        # (D, D)
    w_1 = wmats_ref[D:2 * D, 0:F]                    # (D, F)
    w_2 = wmats_ref[2 * D:2 * D + F, 0:D]            # (F, D)

    # ---- fused QKV projection: one MXU push for Q, K and V ----
    # Q/K/V each sit in their own 128-lane tile -> tile-aligned slices below.
    qkv = jnp.dot(x, wqkv_ref[...],
                  preferred_element_type=jnp.float32) + b_qkv   # (BS, 384)
    q = qkv[:, 0:D]
    k = qkv[:, LANE_TILE:LANE_TILE + D]
    v = qkv[:, 2 * LANE_TILE:2 * LANE_TILE + D]

    # additive block-diagonal batch mask: 0 within a sequence, -1e30 across
    # sequences (prevents the B sequences from attending to each other).
    mask = mask_ref[...]                             # (BS, BS) f32

    # ---- multi-head attention, fully 2-D; head-concat folded into W_o ----
    attn_out = jnp.zeros((BS, D), jnp.float32)
    for h in range(H):                               # static unroll, H = 4
        sl = slice(h * Dh, (h + 1) * Dh)
        qh, kh, vh = q[:, sl], k[:, sl], v[:, sl]    # (BS, Dh) each
        s = jax.lax.dot_general(qh, kh, (((1,), (1,)), ((), ())),
                                preferred_element_type=jnp.float32) + mask
        s = s - jnp.max(s, axis=-1, keepdims=True)
        p = jnp.exp(s)
        p = p / jnp.sum(p, axis=-1, keepdims=True)   # exact division (EUP has slack)
        ctx_h = jnp.dot(p, vh, preferred_element_type=jnp.float32)   # (BS, Dh)
        attn_out = attn_out + jnp.dot(ctx_h, w_o[sl, :],
                                      preferred_element_type=jnp.float32)
    attn_out = attn_out + b_o

    # ---- residual + LayerNorm 1 (dropout == identity in eval mode) ----
    # one-pass moments: var = E[x^2] - mu^2 (fine in f32 at these magnitudes)
    h1 = x + attn_out
    mu1 = jnp.mean(h1, axis=-1, keepdims=True)
    var1 = jnp.mean(h1 * h1, axis=-1, keepdims=True) - mu1 * mu1
    h1 = (h1 - mu1) * jax.lax.rsqrt(var1 + LN_EPS) * g1 + be1

    # ---- feedforward: Linear -> ReLU -> (Dropout=id) -> Linear ----
    f = jnp.maximum(jnp.dot(h1, w_1, preferred_element_type=jnp.float32) + b_1, 0.0)
    f = jnp.dot(f, w_2, preferred_element_type=jnp.float32) + b_2

    # ---- residual + LayerNorm 2 ----
    h2 = h1 + f
    mu2 = jnp.mean(h2, axis=-1, keepdims=True)
    var2 = jnp.mean(h2 * h2, axis=-1, keepdims=True) - mu2 * mu2
    out = (h2 - mu2) * jax.lax.rsqrt(var2 + LN_EPS) * g2 + be2

    o_ref[...] = out.astype(o_ref.dtype)             # (BS, D) direct store


# ------------------------------- wrapper -------------------------------------
@jax.jit
def transformer_encoder_block(x, packed):
    """x: (B, S, D) float32.  packed: dict from pack_params()."""
    Bsz, Sq, Dm = x.shape
    x2 = x.reshape(Bsz * Sq, Dm)                      # flatten batch into tokens

    out2 = pl.pallas_call(
        encoder_block_kernel,
        out_shape=jax.ShapeDtypeStruct((Bsz * Sq, Dm), jnp.float32),
        grid_spec=pltpu.PrefetchScalarGridSpec(
            num_scalar_prefetch=0,
            grid=(1,),                                # whole (tiny) problem in one step
            in_specs=[
                pl.BlockSpec((Bsz * Sq, Dm), lambda i: (0, 0)),          # x (tokens)
                pl.BlockSpec(packed["wqkv"].shape, lambda i: (0, 0)),    # fused QKV W
                pl.BlockSpec(packed["wmats"].shape, lambda i: (0, 0)),   # Wo|W1|W2
                pl.BlockSpec(packed["vec"].shape, lambda i: (0, 0)),     # biases/LN
                pl.BlockSpec(packed["mask"].shape, lambda i: (0, 0)),    # batch mask
            ],
            out_specs=pl.BlockSpec((Bsz * Sq, Dm), lambda i: (0, 0)),
        ),
        compiler_params=pltpu.CompilerParams(
            dimension_semantics=("arbitrary",)),
    )(x2, packed["wqkv"], packed["wmats"], packed["vec"], packed["mask"])

    return out2.reshape(Bsz, Sq, Dm)


# --------------------------- deterministic init -------------------------------
def init_params(key):
    ks = jax.random.split(key, 12)
    n = lambda k, shape, s: (jax.random.normal(k, shape, jnp.float32) * s)
    return {
        "wq": n(ks[0], (D_MODEL, D_MODEL), 0.05), "bq": n(ks[1], (1, D_MODEL), 0.01),
        "wk": n(ks[2], (D_MODEL, D_MODEL), 0.05), "bk": n(ks[3], (1, D_MODEL), 0.01),
        "wv": n(ks[4], (D_MODEL, D_MODEL), 0.05), "bv": n(ks[5], (1, D_MODEL), 0.01),
        "wo": n(ks[6], (D_MODEL, D_MODEL), 0.05), "bo": n(ks[7], (1, D_MODEL), 0.01),
        "w1": n(ks[8], (D_MODEL, FF_HIDDEN), 0.05), "b1": n(ks[9], (1, FF_HIDDEN), 0.01),
        "w2": n(ks[10], (FF_HIDDEN, D_MODEL), 0.05), "b2": n(ks[11], (1, D_MODEL), 0.01),
        "g1": jnp.ones((1, D_MODEL), jnp.float32), "be1": jnp.zeros((1, D_MODEL), jnp.float32),
        "g2": jnp.ones((1, D_MODEL), jnp.float32), "be2": jnp.zeros((1, D_MODEL), jnp.float32),
    }


def pack_params(p):
    """One-time parameter prep (outside the kernel/timed path):
    - fuse QKV into one weight, each projection in its own 128-lane tile,
      1/sqrt(head_dim) folded into the Q columns/bias
    - pack Wo/W1/W2 into one block, pack all 1-D vectors into one (8, 384) slab
    - precompute the additive block-diagonal batch mask."""
    D, F, Dh = D_MODEL, FF_HIDDEN, HEAD_DIM
    scale = Dh ** -0.5

    wqkv = jnp.zeros((D, 3 * LANE_TILE), jnp.float32)
    wqkv = wqkv.at[:, 0:D].set(p["wq"] * scale)
    wqkv = wqkv.at[:, LANE_TILE:LANE_TILE + D].set(p["wk"])
    wqkv = wqkv.at[:, 2 * LANE_TILE:2 * LANE_TILE + D].set(p["wv"])

    wmats = jnp.zeros((2 * D + F, max(D, F)), jnp.float32)
    wmats = wmats.at[0:D, 0:D].set(p["wo"])
    wmats = wmats.at[D:2 * D, 0:F].set(p["w1"])
    wmats = wmats.at[2 * D:2 * D + F, 0:D].set(p["w2"])

    vec = jnp.zeros((8, 3 * LANE_TILE), jnp.float32)
    vec = vec.at[0, 0:D].set(p["bq"][0] * scale)
    vec = vec.at[0, LANE_TILE:LANE_TILE + D].set(p["bk"][0])
    vec = vec.at[0, 2 * LANE_TILE:2 * LANE_TILE + D].set(p["bv"][0])
    vec = vec.at[1, :D].set(p["bo"][0])
    vec = vec.at[2, :F].set(p["b1"][0])
    vec = vec.at[3, :D].set(p["b2"][0])
    vec = vec.at[4, :D].set(p["g1"][0])
    vec = vec.at[5, :D].set(p["be1"][0])
    vec = vec.at[6, :D].set(p["g2"][0])
    vec = vec.at[7, :D].set(p["be2"][0])

    tok_batch = jnp.arange(BS) // S
    mask = jnp.where(tok_batch[:, None] == tok_batch[None, :], 0.0, NEG_INF)
    mask = mask.astype(jnp.float32)                    # (BS, BS)

    return {"wqkv": wqkv, "wmats": wmats, "vec": vec, "mask": mask}


# --------------------------- pure-JAX reference --------------------------------
def reference(x, p):
    def layernorm(h, g, b):
        mu = jnp.mean(h, -1, keepdims=True)
        var = jnp.mean((h - mu) ** 2, -1, keepdims=True)
        return (h - mu) / jnp.sqrt(var + LN_EPS) * g + b

    q = x @ p["wq"] + p["bq"]
    k = x @ p["wk"] + p["bk"]
    v = x @ p["wv"] + p["bv"]
    q = q.reshape(B, S, NUM_HEADS, HEAD_DIM).transpose(0, 2, 1, 3)
    k = k.reshape(B, S, NUM_HEADS, HEAD_DIM).transpose(0, 2, 1, 3)
    v = v.reshape(B, S, NUM_HEADS, HEAD_DIM).transpose(0, 2, 1, 3)
    scores = jnp.einsum("bhsd,bhtd->bhst", q, k) / jnp.sqrt(jnp.float32(HEAD_DIM))
    attn = jax.nn.softmax(scores, axis=-1)
    ctx = jnp.einsum("bhst,bhtd->bhsd", attn, v)
    ctx = ctx.transpose(0, 2, 1, 3).reshape(B, S, D_MODEL)
    attn_out = ctx @ p["wo"] + p["bo"]
    h1 = layernorm(x + attn_out, p["g1"], p["be1"])
    f = jnp.maximum(h1 @ p["w1"] + p["b1"], 0.0) @ p["w2"] + p["b2"]
    return layernorm(h1 + f, p["g2"], p["be2"])


# ----------------------------------- main --------------------------------------
if __name__ == "__main__":
    key = jax.random.PRNGKey(0)
    kx, kp = jax.random.split(key)
    x = jax.random.normal(kx, (B, S, D_MODEL), jnp.float32)
    params = init_params(kp)
    packed = pack_params(params)    # one-time fuse/pack (not in the per-call path)

    out = transformer_encoder_block(x, packed)
    out = jax.block_until_ready(out)

    ref = reference(x, params)
    assert out.shape == (B, S, D_MODEL)
    # exact softmax division -> tight tolerance (EUP rsqrt / one-pass variance only)
    assert jnp.allclose(out, ref, atol=1e-4, rtol=1e-4), "mismatch vs reference"
    print("KERNEL_OK")
</pallas_src>

<mosaic_0001>
module attributes {stable_mosaic.version = 11 : i64} {
  func.func @encoder_block_kernel(%arg0: i32, %arg1: memref<16x32xf32, #tpu.memory_space<vmem>>, %arg2: memref<32x384xf32, #tpu.memory_space<vmem>>, %arg3: memref<128x64xf32, #tpu.memory_space<vmem>>, %arg4: memref<8x384xf32, #tpu.memory_space<vmem>>, %arg5: memref<16x16xf32, #tpu.memory_space<vmem>>, %arg6: memref<16x32xf32, #tpu.memory_space<vmem>>) attributes {dimension_semantics = [#tpu.dimension_semantics<arbitrary>], iteration_bounds = array<i64: 1>, scalar_prefetch = 0 : i64, scratch_operands = 0 : i64, tpu.core_type = #tpu.core_type<tc>, window_params = [{pipeline_mode = #tpu.pipeline_mode<synchronous>, transform_indices = @transform_0, window_bounds = array<i64: 16, 32>}, {pipeline_mode = #tpu.pipeline_mode<synchronous>, transform_indices = @transform_1, window_bounds = array<i64: 32, 384>}, {pipeline_mode = #tpu.pipeline_mode<synchronous>, transform_indices = @transform_2, window_bounds = array<i64: 128, 64>}, {pipeline_mode = #tpu.pipeline_mode<synchronous>, transform_indices = @transform_3, window_bounds = array<i64: 8, 384>}, {pipeline_mode = #tpu.pipeline_mode<synchronous>, transform_indices = @transform_4, window_bounds = array<i64: 16, 16>}, {pipeline_mode = #tpu.pipeline_mode<synchronous>, transform_indices = @transform_5, window_bounds = array<i64: 16, 32>}]} {
    %c0 = arith.constant 0 : index
    %c0_0 = arith.constant 0 : index
    %0 = vector.load %arg1[%c0, %c0_0] : memref<16x32xf32, #tpu.memory_space<vmem>>, vector<16x32xf32>
    %c0_1 = arith.constant 0 : index
    %c0_2 = arith.constant 0 : index
    %1 = vector.load %arg4[%c0_1, %c0_2] : memref<8x384xf32, #tpu.memory_space<vmem>>, vector<8x384xf32>
    %2 = vector.extract_strided_slice %1 {offsets = [0, 0], sizes = [1, 384], strides = [1, 1]} : vector<8x384xf32> to vector<1x384xf32>
    %3 = vector.extract_strided_slice %1 {offsets = [1, 0], sizes = [1, 32], strides = [1, 1]} : vector<8x384xf32> to vector<1x32xf32>
    %4 = vector.extract_strided_slice %1 {offsets = [2, 0], sizes = [1, 64], strides = [1, 1]} : vector<8x384xf32> to vector<1x64xf32>
    %5 = vector.extract_strided_slice %1 {offsets = [3, 0], sizes = [1, 32], strides = [1, 1]} : vector<8x384xf32> to vector<1x32xf32>
    %6 = vector.extract_strided_slice %1 {offsets = [4, 0], sizes = [1, 32], strides = [1, 1]} : vector<8x384xf32> to vector<1x32xf32>
    %7 = vector.extract_strided_slice %1 {offsets = [5, 0], sizes = [1, 32], strides = [1, 1]} : vector<8x384xf32> to vector<1x32xf32>
    %8 = vector.extract_strided_slice %1 {offsets = [6, 0], sizes = [1, 32], strides = [1, 1]} : vector<8x384xf32> to vector<1x32xf32>
    %9 = vector.extract_strided_slice %1 {offsets = [7, 0], sizes = [1, 32], strides = [1, 1]} : vector<8x384xf32> to vector<1x32xf32>
    %c0_3 = arith.constant 0 : index
    %c0_4 = arith.constant 0 : index
    %10 = vector.load %arg3[%c0_3, %c0_4] : memref<128x64xf32, #tpu.memory_space<vmem>>, vector<32x32xf32>
    %c32 = arith.constant 32 : index
    %c0_5 = arith.constant 0 : index
    %11 = vector.load %arg3[%c32, %c0_5] : memref<128x64xf32, #tpu.memory_space<vmem>>, vector<32x64xf32>
    %c64 = arith.constant 64 : index
    %c0_6 = arith.constant 0 : index
    %12 = vector.load %arg3[%c64, %c0_6] : memref<128x64xf32, #tpu.memory_space<vmem>>, vector<64x32xf32>
    %c0_7 = arith.constant 0 : index
    %c0_8 = arith.constant 0 : index
    %13 = vector.load %arg2[%c0_7, %c0_8] : memref<32x384xf32, #tpu.memory_space<vmem>>, vector<32x384xf32>
    %cst = arith.constant dense<0.000000e+00> : vector<16x384xf32>
    %14 = tpu.matmul %0, %13, %cst {dimension_numbers = #tpu.dot_dimension_numbers<[1], [0], [0], [1], [0, 0, 1, 1], [], []>} : vector<16x32xf32>, vector<32x384xf32>, vector<16x384xf32> -> vector<16x384xf32>
    %15 = vector.broadcast %2 : vector<1x384xf32> to vector<16x384xf32>
    %16 = arith.addf %14, %15 : vector<16x384xf32>
    %17 = vector.extract_strided_slice %16 {offsets = [0, 0], sizes = [16, 32], strides = [1, 1]} : vector<16x384xf32> to vector<16x32xf32>
    %18 = vector.extract_strided_slice %16 {offsets = [0, 128], sizes = [16, 32], strides = [1, 1]} : vector<16x384xf32> to vector<16x32xf32>
    %19 = vector.extract_strided_slice %16 {offsets = [0, 256], sizes = [16, 32], strides = [1, 1]} : vector<16x384xf32> to vector<16x32xf32>
    %c0_9 = arith.constant 0 : index
    %c0_10 = arith.constant 0 : index
    %20 = vector.load %arg5[%c0_9, %c0_10] : memref<16x16xf32, #tpu.memory_space<vmem>>, vector<16x16xf32>
    %cst_11 = arith.constant 0.000000e+00 : f32
    %21 = vector.broadcast %cst_11 : f32 to vector<16x32xf32>
    %22 = vector.extract_strided_slice %17 {offsets = [0, 0], sizes = [16, 8], strides = [1, 1]} : vector<16x32xf32> to vector<16x8xf32>
    %23 = vector.extract_strided_slice %18 {offsets = [0, 0], sizes = [16, 8], strides = [1, 1]} : vector<16x32xf32> to vector<16x8xf32>
    %24 = vector.extract_strided_slice %19 {offsets = [0, 0], sizes = [16, 8], strides = [1, 1]} : vector<16x32xf32> to vector<16x8xf32>
    %cst_12 = arith.constant dense<0.000000e+00> : vector<16x16xf32>
    %25 = tpu.matmul %22, %23, %cst_12 {dimension_numbers = #tpu.dot_dimension_numbers<[1], [1], [0], [0], [0, 0, 1, 0], [], []>} : vector<16x8xf32>, vector<16x8xf32>, vector<16x16xf32> -> vector<16x16xf32>
    %26 = arith.addf %25, %20 : vector<16x16xf32>
    %cst_13 = arith.constant dense<0xFF800000> : vector<16xf32>
    %27 = vector.multi_reduction <maximumf>, %26, %cst_13 [1] : vector<16x16xf32> to vector<16xf32>
    %28 = vector.shape_cast %27 : vector<16xf32> to vector<16x1xf32>
    %29 = vector.broadcast %28 : vector<16x1xf32> to vector<16x16xf32>
    %30 = arith.subf %26, %29 : vector<16x16xf32>
    %31 = math.exp %30 : vector<16x16xf32>
    %cst_14 = arith.constant dense<0.000000e+00> : vector<16xf32>
    %32 = vector.multi_reduction <add>, %31, %cst_14 [1] : vector<16x16xf32> to vector<16xf32>
    %33 = vector.shape_cast %32 : vector<16xf32> to vector<16x1xf32>
    %34 = vector.broadcast %33 : vector<16x1xf32> to vector<16x16xf32>
    %35 = arith.divf %31, %34 : vector<16x16xf32>
    %cst_15 = arith.constant dense<0.000000e+00> : vector<16x8xf32>
    %36 = tpu.matmul %35, %24, %cst_15 {dimension_numbers = #tpu.dot_dimension_numbers<[1], [0], [0], [1], [0, 0, 1, 1], [], []>} : vector<16x16xf32>, vector<16x8xf32>, vector<16x8xf32> -> vector<16x8xf32>
    %37 = vector.extract_strided_slice %10 {offsets = [0, 0], sizes = [8, 32], strides = [1, 1]} : vector<32x32xf32> to vector<8x32xf32>
    %cst_16 = arith.constant dense<0.000000e+00> : vector<16x32xf32>
    %38 = tpu.matmul %36, %37, %cst_16 {dimension_numbers = #tpu.dot_dimension_numbers<[1], [0], [0], [1], [0, 0, 1, 1], [], []>} : vector<16x8xf32>, vector<8x32xf32>, vector<16x32xf32> -> vector<16x32xf32>
    %39 = arith.addf %21, %38 : vector<16x32xf32>
    %40 = vector.extract_strided_slice %17 {offsets = [0, 8], sizes = [16, 8], strides = [1, 1]} : vector<16x32xf32> to vector<16x8xf32>
    %41 = vector.extract_strided_slice %18 {offsets = [0, 8], sizes = [16, 8], strides = [1, 1]} : vector<16x32xf32> to vector<16x8xf32>
    %42 = vector.extract_strided_slice %19 {offsets = [0, 8], sizes = [16, 8], strides = [1, 1]} : vector<16x32xf32> to vector<16x8xf32>
    %cst_17 = arith.constant dense<0.000000e+00> : vector<16x16xf32>
    %43 = tpu.matmul %40, %41, %cst_17 {dimension_numbers = #tpu.dot_dimension_numbers<[1], [1], [0], [0], [0, 0, 1, 0], [], []>} : vector<16x8xf32>, vector<16x8xf32>, vector<16x16xf32> -> vector<16x16xf32>
    %44 = arith.addf %43, %20 : vector<16x16xf32>
    %cst_18 = arith.constant dense<0xFF800000> : vector<16xf32>
    %45 = vector.multi_reduction <maximumf>, %44, %cst_18 [1] : vector<16x16xf32> to vector<16xf32>
    %46 = vector.shape_cast %45 : vector<16xf32> to vector<16x1xf32>
    %47 = vector.broadcast %46 : vector<16x1xf32> to vector<16x16xf32>
    %48 = arith.subf %44, %47 : vector<16x16xf32>
    %49 = math.exp %48 : vector<16x16xf32>
    %cst_19 = arith.constant dense<0.000000e+00> : vector<16xf32>
    %50 = vector.multi_reduction <add>, %49, %cst_19 [1] : vector<16x16xf32> to vector<16xf32>
    %51 = vector.shape_cast %50 : vector<16xf32> to vector<16x1xf32>
    %52 = vector.broadcast %51 : vector<16x1xf32> to vector<16x16xf32>
    %53 = arith.divf %49, %52 : vector<16x16xf32>
    %cst_20 = arith.constant dense<0.000000e+00> : vector<16x8xf32>
    %54 = tpu.matmul %53, %42, %cst_20 {dimension_numbers = #tpu.dot_dimension_numbers<[1], [0], [0], [1], [0, 0, 1, 1], [], []>} : vector<16x16xf32>, vector<16x8xf32>, vector<16x8xf32> -> vector<16x8xf32>
    %55 = vector.extract_strided_slice %10 {offsets = [8, 0], sizes = [8, 32], strides = [1, 1]} : vector<32x32xf32> to vector<8x32xf32>
    %cst_21 = arith.constant dense<0.000000e+00> : vector<16x32xf32>
    %56 = tpu.matmul %54, %55, %cst_21 {dimension_numbers = #tpu.dot_dimension_numbers<[1], [0], [0], [1], [0, 0, 1, 1], [], []>} : vector<16x8xf32>, vector<8x32xf32>, vector<16x32xf32> -> vector<16x32xf32>
    %57 = arith.addf %39, %56 : vector<16x32xf32>
    %58 = vector.extract_strided_slice %17 {offsets = [0, 16], sizes = [16, 8], strides = [1, 1]} : vector<16x32xf32> to vector<16x8xf32>
    %59 = vector.extract_strided_slice %18 {offsets = [0, 16], sizes = [16, 8], strides = [1, 1]} : vector<16x32xf32> to vector<16x8xf32>
    %60 = vector.extract_strided_slice %19 {offsets = [0, 16], sizes = [16, 8], strides = [1, 1]} : vector<16x32xf32> to vector<16x8xf32>
    %cst_22 = arith.constant dense<0.000000e+00> : vector<16x16xf32>
    %61 = tpu.matmul %58, %59, %cst_22 {dimension_numbers = #tpu.dot_dimension_numbers<[1], [1], [0], [0], [0, 0, 1, 0], [], []>} : vector<16x8xf32>, vector<16x8xf32>, vector<16x16xf32> -> vector<16x16xf32>
    %62 = arith.addf %61, %20 : vector<16x16xf32>
    %cst_23 = arith.constant dense<0xFF800000> : vector<16xf32>
    %63 = vector.multi_reduction <maximumf>, %62, %cst_23 [1] : vector<16x16xf32> to vector<16xf32>
    %64 = vector.shape_cast %63 : vector<16xf32> to vector<16x1xf32>
    %65 = vector.broadcast %64 : vector<16x1xf32> to vector<16x16xf32>
    %66 = arith.subf %62, %65 : vector<16x16xf32>
    %67 = math.exp %66 : vector<16x16xf32>
    %cst_24 = arith.constant dense<0.000000e+00> : vector<16xf32>
    %68 = vector.multi_reduction <add>, %67, %cst_24 [1] : vector<16x16xf32> to vector<16xf32>
    %69 = vector.shape_cast %68 : vector<16xf32> to vector<16x1xf32>
    %70 = vector.broadcast %69 : vector<16x1xf32> to vector<16x16xf32>
    %71 = arith.divf %67, %70 : vector<16x16xf32>
    %cst_25 = arith.constant dense<0.000000e+00> : vector<16x8xf32>
    %72 = tpu.matmul %71, %60, %cst_25 {dimension_numbers = #tpu.dot_dimension_numbers<[1], [0], [0], [1], [0, 0, 1, 1], [], []>} : vector<16x16xf32>, vector<16x8xf32>, vector<16x8xf32> -> vector<16x8xf32>
    %73 = vector.extract_strided_slice %10 {offsets = [16, 0], sizes = [8, 32], strides = [1, 1]} : vector<32x32xf32> to vector<8x32xf32>
    %cst_26 = arith.constant dense<0.000000e+00> : vector<16x32xf32>
    %74 = tpu.matmul %72, %73, %cst_26 {dimension_numbers = #tpu.dot_dimension_numbers<[1], [0], [0], [1], [0, 0, 1, 1], [], []>} : vector<16x8xf32>, vector<8x32xf32>, vector<16x32xf32> -> vector<16x32xf32>
    %75 = arith.addf %57, %74 : vector<16x32xf32>
    %76 = vector.extract_strided_slice %17 {offsets = [0, 24], sizes = [16, 8], strides = [1, 1]} : vector<16x32xf32> to vector<16x8xf32>
    %77 = vector.extract_strided_slice %18 {offsets = [0, 24], sizes = [16, 8], strides = [1, 1]} : vector<16x32xf32> to vector<16x8xf32>
    %78 = vector.extract_strided_slice %19 {offsets = [0, 24], sizes = [16, 8], strides = [1, 1]} : vector<16x32xf32> to vector<16x8xf32>
    %cst_27 = arith.constant dense<0.000000e+00> : vector<16x16xf32>
    %79 = tpu.matmul %76, %77, %cst_27 {dimension_numbers = #tpu.dot_dimension_numbers<[1], [1], [0], [0], [0, 0, 1, 0], [], []>} : vector<16x8xf32>, vector<16x8xf32>, vector<16x16xf32> -> vector<16x16xf32>
    %80 = arith.addf %79, %20 : vector<16x16xf32>
    %cst_28 = arith.constant dense<0xFF800000> : vector<16xf32>
    %81 = vector.multi_reduction <maximumf>, %80, %cst_28 [1] : vector<16x16xf32> to vector<16xf32>
    %82 = vector.shape_cast %81 : vector<16xf32> to vector<16x1xf32>
    %83 = vector.broadcast %82 : vector<16x1xf32> to vector<16x16xf32>
    %84 = arith.subf %80, %83 : vector<16x16xf32>
    %85 = math.exp %84 : vector<16x16xf32>
    %cst_29 = arith.constant dense<0.000000e+00> : vector<16xf32>
    %86 = vector.multi_reduction <add>, %85, %cst_29 [1] : vector<16x16xf32> to vector<16xf32>
    %87 = vector.shape_cast %86 : vector<16xf32> to vector<16x1xf32>
    %88 = vector.broadcast %87 : vector<16x1xf32> to vector<16x16xf32>
    %89 = arith.divf %85, %88 : vector<16x16xf32>
    %cst_30 = arith.constant dense<0.000000e+00> : vector<16x8xf32>
    %90 = tpu.matmul %89, %78, %cst_30 {dimension_numbers = #tpu.dot_dimension_numbers<[1], [0], [0], [1], [0, 0, 1, 1], [], []>} : vector<16x16xf32>, vector<16x8xf32>, vector<16x8xf32> -> vector<16x8xf32>
    %91 = vector.extract_strided_slice %10 {offsets = [24, 0], sizes = [8, 32], strides = [1, 1]} : vector<32x32xf32> to vector<8x32xf32>
    %cst_31 = arith.constant dense<0.000000e+00> : vector<16x32xf32>
    %92 = tpu.matmul %90, %91, %cst_31 {dimension_numbers = #tpu.dot_dimension_numbers<[1], [0], [0], [1], [0, 0, 1, 1], [], []>} : vector<16x8xf32>, vector<8x32xf32>, vector<16x32xf32> -> vector<16x32xf32>
    %93 = arith.addf %75, %92 : vector<16x32xf32>
    %94 = vector.broadcast %3 : vector<1x32xf32> to vector<16x32xf32>
    %95 = arith.addf %93, %94 : vector<16x32xf32>
    %96 = arith.addf %0, %95 : vector<16x32xf32>
    %cst_32 = arith.constant dense<0.000000e+00> : vector<16xf32>
    %97 = vector.multi_reduction <add>, %96, %cst_32 [1] : vector<16x32xf32> to vector<16xf32>
    %98 = vector.shape_cast %97 : vector<16xf32> to vector<16x1xf32>
    %cst_33 = arith.constant 3.200000e+01 : f32
    %99 = vector.broadcast %cst_33 : f32 to vector<16x1xf32>
    %100 = arith.divf %98, %99 : vector<16x1xf32>
    %101 = arith.mulf %96, %96 : vector<16x32xf32>
    %cst_34 = arith.constant dense<0.000000e+00> : vector<16xf32>
    %102 = vector.multi_reduction <add>, %101, %cst_34 [1] : vector<16x32xf32> to vector<16xf32>
    %103 = vector.shape_cast %102 : vector<16xf32> to vector<16x1xf32>
    %cst_35 = arith.constant 3.200000e+01 : f32
    %104 = vector.broadcast %cst_35 : f32 to vector<16x1xf32>
    %105 = arith.divf %103, %104 : vector<16x1xf32>
    %106 = arith.mulf %100, %100 : vector<16x1xf32>
    %107 = arith.subf %105, %106 : vector<16x1xf32>
    %108 = vector.broadcast %100 : vector<16x1xf32> to vector<16x32xf32>
    %109 = arith.subf %96, %108 : vector<16x32xf32>
    %cst_36 = arith.constant 9.99999974E-6 : f32
    %110 = vector.broadcast %cst_36 : f32 to vector<16x1xf32>
    %111 = arith.addf %107, %110 : vector<16x1xf32>
    %112 = math.rsqrt %111 : vector<16x1xf32>
    %113 = vector.broadcast %112 : vector<16x1xf32> to vector<16x32xf32>
    %114 = arith.mulf %109, %113 : vector<16x32xf32>
    %115 = vector.broadcast %6 : vector<1x32xf32> to vector<16x32xf32>
    %116 = arith.mulf %114, %115 : vector<16x32xf32>
    %117 = vector.broadcast %7 : vector<1x32xf32> to vector<16x32xf32>
    %118 = arith.addf %116, %117 : vector<16x32xf32>
    %cst_37 = arith.constant dense<0.000000e+00> : vector<16x64xf32>
    %119 = tpu.matmul %118, %11, %cst_37 {dimension_numbers = #tpu.dot_dimension_numbers<[1], [0], [0], [1], [0, 0, 1, 1], [], []>} : vector<16x32xf32>, vector<32x64xf32>, vector<16x64xf32> -> vector<16x64xf32>
    %120 = vector.broadcast %4 : vector<1x64xf32> to vector<16x64xf32>
    %121 = arith.addf %119, %120 : vector<16x64xf32>
    %cst_38 = arith.constant 0.000000e+00 : f32
    %122 = vector.broadcast %cst_38 : f32 to vector<16x64xf32>
    %123 = arith.maximumf %121, %122 : vector<16x64xf32>
    %cst_39 = arith.constant dense<0.000000e+00> : vector<16x32xf32>
    %124 = tpu.matmul %123, %12, %cst_39 {dimension_numbers = #tpu.dot_dimension_numbers<[1], [0], [0], [1], [0, 0, 1, 1], [], []>} : vector<16x64xf32>, vector<64x32xf32>, vector<16x32xf32> -> vector<16x32xf32>
    %125 = vector.broadcast %5 : vector<1x32xf32> to vector<16x32xf32>
    %126 = arith.addf %124, %125 : vector<16x32xf32>
    %127 = arith.addf %118, %126 : vector<16x32xf32>
    %cst_40 = arith.constant dense<0.000000e+00> : vector<16xf32>
    %128 = vector.multi_reduction <add>, %127, %cst_40 [1] : vector<16x32xf32> to vector<16xf32>
    %129 = vector.shape_cast %128 : vector<16xf32> to vector<16x1xf32>
    %cst_41 = arith.constant 3.200000e+01 : f32
    %130 = vector.broadcast %cst_41 : f32 to vector<16x1xf32>
    %131 = arith.divf %129, %130 : vector<16x1xf32>
    %132 = arith.mulf %127, %127 : vector<16x32xf32>
    %cst_42 = arith.constant dense<0.000000e+00> : vector<16xf32>
    %133 = vector.multi_reduction <add>, %132, %cst_42 [1] : vector<16x32xf32> to vector<16xf32>
    %134 = vector.shape_cast %133 : vector<16xf32> to vector<16x1xf32>
    %cst_43 = arith.constant 3.200000e+01 : f32
    %135 = vector.broadcast %cst_43 : f32 to vector<16x1xf32>
    %136 = arith.divf %134, %135 : vector<16x1xf32>
    %137 = arith.mulf %131, %131 : vector<16x1xf32>
    %138 = arith.subf %136, %137 : vector<16x1xf32>
    %139 = vector.broadcast %131 : vector<16x1xf32> to vector<16x32xf32>
    %140 = arith.subf %127, %139 : vector<16x32xf32>
    %cst_44 = arith.constant 9.99999974E-6 : f32
    %141 = vector.broadcast %cst_44 : f32 to vector<16x1xf32>
    %142 = arith.addf %138, %141 : vector<16x1xf32>
    %143 = math.rsqrt %142 : vector<16x1xf32>
    %144 = vector.broadcast %143 : vector<16x1xf32> to vector<16x32xf32>
    %145 = arith.mulf %140, %144 : vector<16x32xf32>
    %146 = vector.broadcast %8 : vector<1x32xf32> to vector<16x32xf32>
    %147 = arith.mulf %145, %146 : vector<16x32xf32>
    %148 = vector.broadcast %9 : vector<1x32xf32> to vector<16x32xf32>
    %149 = arith.addf %147, %148 : vector<16x32xf32>
    %c0_45 = arith.constant 0 : index
    %c0_46 = arith.constant 0 : index
    %150 = vector.load %arg6[%c0_45, %c0_46] : memref<16x32xf32, #tpu.memory_space<vmem>>, vector<16x32xf32>
    tpu.vector_store %arg6[%c0_45, %c0_46], %149 {strides = array<i32>} : memref<16x32xf32, #tpu.memory_space<vmem>>, vector<16x32xf32>,
    return
  }
  func.func @transform_0(%arg0: i32) -> (i32, i32) {
    %c0_i32 = arith.constant 0 : i32
    %c0_i32_0 = arith.constant 0 : i32
    %c0_i32_1 = arith.constant 0 : i32
    return %c0_i32, %c0_i32_0 : i32, i32
  }
  func.func @transform_1(%arg0: i32) -> (i32, i32) {
    %c0_i32 = arith.constant 0 : i32
    %c0_i32_0 = arith.constant 0 : i32
    %c0_i32_1 = arith.constant 0 : i32
    return %c0_i32, %c0_i32_0 : i32, i32
  }
  func.func @transform_2(%arg0: i32) -> (i32, i32) {
    %c0_i32 = arith.constant 0 : i32
    %c0_i32_0 = arith.constant 0 : i32
    %c0_i32_1 = arith.constant 0 : i32
    return %c0_i32, %c0_i32_0 : i32, i32
  }
  func.func @transform_3(%arg0: i32) -> (i32, i32) {
    %c0_i32 = arith.constant 0 : i32
    %c0_i32_0 = arith.constant 0 : i32
    %c0_i32_1 = arith.constant 0 : i32
    return %c0_i32, %c0_i32_0 : i32, i32
  }
  func.func @transform_4(%arg0: i32) -> (i32, i32) {
    %c0_i32 = arith.constant 0 : i32
    %c0_i32_0 = arith.constant 0 : i32
    %c0_i32_1 = arith.constant 0 : i32
    return %c0_i32, %c0_i32_0 : i32, i32
  }
  func.func @transform_5(%arg0: i32) -> (i32, i32) {
    %c0_i32 = arith.constant 0 : i32
    %c0_i32_0 = arith.constant 0 : i32
    %c0_i32_1 = arith.constant 0 : i32
    return %c0_i32, %c0_i32_0 : i32, i32
  }
}

</mosaic_0001>

<llo_original>
// kernel: transformer_encoder_block.1
$region0: #{transformer_encoder_block.1}
  #allocation0 [shape = 'u32[]', space=smem, size = 0x4, offset = 0x4, fixed_abs, tag = 'smem constant byte address 0x4 - core index']
  #allocation1 [shape = 'u32[144,128]{1,0:T(1,128)}', space=vmem, size = 0x12000, scoped, tag = 'internal scratch']
  %s0 = inlined_call_operand.vmem [shape: f32[16,32], index: 0, kind: input, shape index: {}]
  %s1 = inlined_call_operand.vmem [shape: f32[32,384], index: 1, kind: input, shape index: {}]
  %s2 = inlined_call_operand.vmem [shape: f32[128,64], index: 2, kind: input, shape index: {}]
  %s3 = inlined_call_operand.vmem [shape: f32[8,384], index: 3, kind: input, shape index: {}]
  %s4 = inlined_call_operand.vmem [shape: f32[16,16], index: 4, kind: input, shape index: {}]
  %s5 = inlined_call_operand.hbm [shape: f32[16,32], index: 5, kind: output, shape index: {}]
  %s6 = sld [smem:[#allocation0]]
  $region30: #{transformer_encoder_block.1} parent=0
    _
  %s8 = ssub.s32 1, %s6
  %s9 = scalar_select 0, %s8, %s6
  $region1: #{transformer_encoder_block.1} parent=0
    #allocation2 [shape = 'u8[8192]{0}', space=vmem, size = 0x2000, scoped, tag = 'output window, operand 0, single buffered']
    #allocation3 [shape = 's32[1]{0}', space=sflag, size = 0x4, scoped, tag = 'scoped memory for transformer_encoder_block.1']
    %10 = vsyncpa [#allocation3], 0
    // Predicated region
    $region2: #{transformer_encoder_block.1} parent=1 // pred_check
      _
    $region3: #{transformer_encoder_block.1} parent=1 // pred_check_branch
      %12 = sbr.rel (0) target = $region5
    $region4: #{transformer_encoder_block.1} parent=1 // pred_region
      _
    $region5: #{transformer_encoder_block.1} parent=1 // pred_fallthru
      _
    // Predicated region
    $region6: #{transformer_encoder_block.1} parent=1 // pred_check
      _
    $region7: #{transformer_encoder_block.1} parent=1 // pred_check_branch
      %14 = sbr.rel (0) target = $region9
    $region8: #{transformer_encoder_block.1} parent=1 // pred_region
      _
    $region9: #{transformer_encoder_block.1} parent=1 // pred_fallthru
      _
    // Predicated region
    $region10: #{transformer_encoder_block.1} parent=1 // pred_check
      _
    $region11: #{transformer_encoder_block.1} parent=1 // pred_check_branch
      %16 = sbr.rel (0) target = $region13
    $region12: #{transformer_encoder_block.1} parent=1 // pred_region
      _
    $region13: #{transformer_encoder_block.1} parent=1 // pred_fallthru
      _
    // Predicated region
    $region14: #{transformer_encoder_block.1} parent=1 // pred_check
      _
    $region15: #{transformer_encoder_block.1} parent=1 // pred_check_branch
      %18 = sbr.rel (0) target = $region17
    $region16: #{transformer_encoder_block.1} parent=1 // pred_region
      _
    $region17: #{transformer_encoder_block.1} parent=1 // pred_fallthru
      _
    // Predicated region
    $region18: #{transformer_encoder_block.1} parent=1 // pred_check
      _
    $region19: #{transformer_encoder_block.1} parent=1 // pred_check_branch
      %20 = sbr.rel (0) target = $region21
    $region20: #{transformer_encoder_block.1} parent=1 // pred_region
      _
    $region21: #{transformer_encoder_block.1} parent=1 // pred_fallthru
      _
    %v21 = vld [vmem:[%s0] sm:$0xff]
    %v22 = vld [vmem:[%s0 + $0x8] sm:$0xff]
    %v23 = vld [vmem:[%s3] sm:$0xff]
    %v24 = vld [vmem:[%s3 + $0x8] sm:$0xff]
    %v25 = vld [vmem:[%s3 + $0x10] sm:$0xff]
    %v26 = vld [vmem:[%s2] sm:$0xff]
    %v27 = vld [vmem:[%s2 + $0x8] sm:$0xff]
    %v28 = vld [vmem:[%s2 + $0x10] sm:$0xff]
    %v29 = vld [vmem:[%s2 + $0x18] sm:$0xff]
    %v30 = vld [vmem:[%s2 + $0x20] sm:$0xff]
    %v31 = vld [vmem:[%s2 + $0x28] sm:$0xff]
    %v32 = vld [vmem:[%s2 + $0x30] sm:$0xff]
    %v33 = vld [vmem:[%s2 + $0x38] sm:$0xff]
    %v34 = vld [vmem:[%s2 + $0x40] sm:$0xff]
    %v35 = vld [vmem:[%s2 + $0x48] sm:$0xff]
    %v36 = vld [vmem:[%s2 + $0x50] sm:$0xff]
    %v37 = vld [vmem:[%s2 + $0x58] sm:$0xff]
    %v38 = vld [vmem:[%s2 + $0x60] sm:$0xff]
    %v39 = vld [vmem:[%s2 + $0x68] sm:$0xff]
    %v40 = vld [vmem:[%s2 + $0x70] sm:$0xff]
    %v41 = vld [vmem:[%s2 + $0x78] sm:$0xff]
    %v42 = vld [vmem:[%s1] sm:$0xff]
    %v43 = vld [vmem:[%s1 + $0x8] sm:$0xff]
    %v44 = vld [vmem:[%s1 + $0x10] sm:$0xff]
    %v45 = vld [vmem:[%s1 + $0x18] sm:$0xff]
    %v46 = vld [vmem:[%s1 + $0x20] sm:$0xff]
    %v47 = vld [vmem:[%s1 + $0x28] sm:$0xff]
    %v48 = vld [vmem:[%s1 + $0x30] sm:$0xff]
    %v49 = vld [vmem:[%s1 + $0x38] sm:$0xff]
    %v50 = vld [vmem:[%s1 + $0x40] sm:$0xff]
    %v51 = vld [vmem:[%s1 + $0x48] sm:$0xff]
    %v52 = vld [vmem:[%s1 + $0x50] sm:$0xff]
    %v53 = vld [vmem:[%s1 + $0x58] sm:$0xff]
    %v54 = vlaneseq
    %v55 = vshrl.u32 %v54, 7
    %v56 = vsub.s32 0, %v55
    %v57 = vrot.slane %v23, %v56
    %v58 = vlaneseq
    %v59 = vshrl.u32 %v58, 7
    %v60 = vsub.s32 0, %v59
    %v61 = vrot.slane %v24, %v60
    %v62 = vlaneseq
    %v63 = vshrl.u32 %v62, 7
    %v64 = vsub.s32 0, %v63
    %v65 = vrot.slane %v25, %v64
    %vm66 = vcmask 261120
    %v68 = vsel %vm66, %v21, 0
    %v71 = vsel %vm66, %v22, 0
    %73 = vmatprep.subr.mxu0 %v43
    %74 = vmatpush1.msra.mxu0 %v42
    %75 = vmatprep.subr.mxu0 %v46
    %76 = vmatpush1.msra.mxu0 %v45
    %77 = vmatprep.subr.mxu0 %v49
    %78 = vmatpush1.msra.mxu0 %v48
    %79 = vmatprep.subr.mxu0 %v52
    %80 = vmatpush1.msra.mxu0 %v51
    %81 = vmatprep.subr.mxu0 0.0
    %82 = vmatpush1.msra.mxu0 0.0
    %83 = vmatprep.subr.mxu0 0.0
    %84 = vmatpush1.msra.mxu0 0.0
    %85 = vmatprep.subr.mxu0 0.0
    %86 = vmatpush1.msra.mxu0 0.0
    %87 = vmatprep.subr.mxu0 0.0
    %88 = vmatpush1.msra.mxu0 0.0
    %89 = vmatprep.subr.mxu0 0.0
    %90 = vmatpush1.msra.mxu0 0.0
    %91 = vmatprep.subr.mxu0 0.0
    %92 = vmatpush1.msra.mxu0 0.0
    %93 = vmatprep.subr.mxu0 0.0
    %94 = vmatpush1.msra.mxu0 0.0
    %95 = vmatprep.subr.mxu0 0.0
    %96 = vmatpush1.msra.mxu0 0.0
    %97 = vmatprep.subr.mxu0 0.0
    %98 = vmatpush1.msra.mxu0 0.0
    %99 = vmatprep.subr.mxu0 0.0
    %100 = vmatpush1.msra.mxu0 0.0
    %101 = vmatprep.subr.mxu0 0.0
    %102 = vmatpush1.msra.mxu0 0.0
    %103 = vmatprep.subr.mxu0 0.0
    %104 = vmatpush1.msra.mxu0 0.0
    %105 = vmatprep.subr.mxu0 0.0
    %106 = vmatpush1.msra.mxu0 0.0
    %107 = vmatprep.subr.mxu0 0.0
    %108 = vmatpush1.msra.mxu0 0.0
    %109 = vmatprep.subr.mxu0 0.0
    %110 = vmatpush1.msra.mxu0 0.0
    %111 = vmatprep.subr.mxu0 0.0
    %112 = vmatpush1.msra.mxu0 0.0
    %113 = vmatprep.subr.mxu0 0.0
    %114 = vmatpush1.msra.mxu0 0.0
    %115 = vmatprep.subr.mxu0 0.0
    %116 = vmatpush1.msra.mxu0 0.0
    %117 = vmatprep.subr.mxu0 0.0
    %118 = vmatpush1.msra.mxu0 0.0
    %119 = vmatprep.subr.mxu0 0.0
    %120 = vmatpush1.msra.mxu0 0.0
    %121 = vmatprep.subr.mxu0 0.0
    %122 = vmatpush1.msra.mxu0 0.0
    %123 = vmatprep.subr.mxu0 0.0
    %124 = vmatpush1.msra.mxu0 0.0
    %125 = vmatprep.subr.mxu0 0.0
    %126 = vmatpush1.msra.mxu0 0.0
    %127 = vmatprep.subr.mxu0 0.0
    %128 = vmatpush1.msra.mxu0 0.0
    %129 = vmatprep.subr.mxu0 0.0
    %130 = vmatpush1.msra.mxu0 0.0
    %131 = vmatprep.subr.mxu0 0.0
    %132 = vmatpush1.msra.mxu0 0.0
    %133 = vmatprep.subr.mxu0 0.0
    %134 = vmatpush1.msra.mxu0 0.0
    %135 = vmatprep.subr.mxu0 0.0
    %136 = vmatpush1.msra.mxu0 0.0
    %137 = vmatprep.mubr.f32.mxu0 0.0
    %138 = vmatmul.mubr.f32.gmra.mrb[0].mxu0 %v68
    %v139 = vpop.f32.mrb[0].mxu0
    %v140 = vadd.f32 %v57, %v139
    %v141 = vpop.f32.mrb[0].mxu0
    %v142 = vadd.f32 %v61, %v141
    %143 = vmatprep.mubr.f32.mxu0 0.0
    %144 = vmatmul.mubr.f32.gmra.mrb[0].mxu0 %v71
    %v145 = vpop.f32.mrb[0].mxu0
    %v146 = vadd.f32 %v57, %v145
    %v147 = vpop.f32.mrb[0].mxu0
    %v148 = vadd.f32 %v61, %v147
    %149 = vdwg.mxu0
    %150 = vmatprep.subr.mxu0 0.0
    %151 = vmatpush1.msra.mxu0 %v44
    %152 = vmatprep.subr.mxu0 0.0
    %153 = vmatpush1.msra.mxu0 %v47
    %154 = vmatprep.subr.mxu0 0.0
    %155 = vmatpush1.msra.mxu0 %v50
    %156 = vmatprep.subr.mxu0 0.0
    %157 = vmatpush1.msra.mxu0 %v53
    %158 = vmatprep.subr.mxu0 0.0
    %159 = vmatpush1.msra.mxu0 0.0
    %160 = vmatprep.subr.mxu0 0.0
    %161 = vmatpush1.msra.mxu0 0.0
    %162 = vmatprep.subr.mxu0 0.0
    %163 = vmatpush1.msra.mxu0 0.0
    %164 = vmatprep.subr.mxu0 0.0
    %165 = vmatpush1.msra.mxu0 0.0
    %166 = vmatprep.subr.mxu0 0.0
    %167 = vmatpush1.msra.mxu0 0.0
    %168 = vmatprep.subr.mxu0 0.0
    %169 = vmatpush1.msra.mxu0 0.0
    %170 = vmatprep.subr.mxu0 0.0
    %171 = vmatpush1.msra.mxu0 0.0
    %172 = vmatprep.subr.mxu0 0.0
    %173 = vmatpush1.msra.mxu0 0.0
    %174 = vmatprep.subr.mxu0 0.0
    %175 = vmatpush1.msra.mxu0 0.0
    %176 = vmatprep.subr.mxu0 0.0
    %177 = vmatpush1.msra.mxu0 0.0
    %178 = vmatprep.subr.mxu0 0.0
    %179 = vmatpush1.msra.mxu0 0.0
    %180 = vmatprep.subr.mxu0 0.0
    %181 = vmatpush1.msra.mxu0 0.0
    %182 = vmatprep.subr.mxu0 0.0
    %183 = vmatpush1.msra.mxu0 0.0
    %184 = vmatprep.subr.mxu0 0.0
    %185 = vmatpush1.msra.mxu0 0.0
    %186 = vmatprep.subr.mxu0 0.0
    %187 = vmatpush1.msra.mxu0 0.0
    %188 = vmatprep.subr.mxu0 0.0
    %189 = vmatpush1.msra.mxu0 0.0
    %190 = vmatprep.subr.mxu0 0.0
    %191 = vmatpush1.msra.mxu0 0.0
    %192 = vmatprep.subr.mxu0 0.0
    %193 = vmatpush1.msra.mxu0 0.0
    %194 = vmatprep.subr.mxu0 0.0
    %195 = vmatpush1.msra.mxu0 0.0
    %196 = vmatprep.subr.mxu0 0.0
    %197 = vmatpush1.msra.mxu0 0.0
    %198 = vmatprep.subr.mxu0 0.0
    %199 = vmatpush1.msra.mxu0 0.0
    %200 = vmatprep.subr.mxu0 0.0
    %201 = vmatpush1.msra.mxu0 0.0
    %202 = vmatprep.subr.mxu0 0.0
    %203 = vmatpush1.msra.mxu0 0.0
    %204 = vmatprep.subr.mxu0 0.0
    %205 = vmatpush1.msra.mxu0 0.0
    %206 = vmatprep.subr.mxu0 0.0
    %207 = vmatpush1.msra.mxu0 0.0
    %208 = vmatprep.subr.mxu0 0.0
    %209 = vmatpush1.msra.mxu0 0.0
    %210 = vmatprep.subr.mxu0 0.0
    %211 = vmatpush1.msra.mxu0 0.0
    %212 = vmatprep.subr.mxu0 0.0
    %213 = vmatpush1.msra.mxu0 0.0
    %214 = vmatprep.mubr.f32.mxu0 0.0
    %215 = vmatmul.mubr.f32.gmra.mrb[0].mxu0 %v68
    %v216 = vpop.f32.mrb[0].mxu0
    %v217 = vadd.f32 %v65, %v216
    %v218 = vpop.f32.mrb[0].mxu0
    %219 = vmatprep.mubr.f32.mxu0 0.0
    %220 = vmatmul.mubr.f32.gmra.mrb[0].mxu0 %v71
    %v221 = vpop.f32.mrb[0].mxu0
    %v222 = vadd.f32 %v65, %v221
    %v223 = vpop.f32.mrb[0].mxu0
    %224 = vdwg.mxu0
    %v225 = vld [vmem:[%s4] sm:$0xff]
    %v226 = vld [vmem:[%s4 + $0x8] sm:$0xff]
    %vm227 = vcmask 64512
    %v229 = vsel %vm227, %v140, 0
    %v232 = vsel %vm227, %v146, 0
    %v235 = vsel %vm227, %v142, 0
    %v238 = vsel %vm227, %v148, 0
    %240 = vmatprep.subr.mxu0 0.0
    %241 = vmatpush1.xpose.msra.mxu0 %v235
    %242 = vmatprep.subr.mxu0 0.0
    %243 = vmatpush1.xpose.msra.mxu0 %v238
    %244 = vmatprep.subr.mxu0 0.0
    %245 = vmatpush1.xpose.msra.mxu0 0.0
    %246 = vmatprep.subr.mxu0 0.0
    %247 = vmatpush1.xpose.msra.mxu0 0.0
    %248 = vmatprep.subr.mxu0 0.0
    %249 = vmatpush1.xpose.msra.mxu0 0.0
    %250 = vmatprep.subr.mxu0 0.0
    %251 = vmatpush1.xpose.msra.mxu0 0.0
    %252 = vmatprep.subr.mxu0 0.0
    %253 = vmatpush1.xpose.msra.mxu0 0.0
    %254 = vmatprep.subr.mxu0 0.0
    %255 = vmatpush1.xpose.msra.mxu0 0.0
    %256 = vmatprep.subr.mxu0 0.0
    %257 = vmatpush1.xpose.msra.mxu0 0.0
    %258 = vmatprep.subr.mxu0 0.0
    %259 = vmatpush1.xpose.msra.mxu0 0.0
    %260 = vmatprep.subr.mxu0 0.0
    %261 = vmatpush1.xpose.msra.mxu0 0.0
    %262 = vmatprep.subr.mxu0 0.0
    %263 = vmatpush1.xpose.msra.mxu0 0.0
    %264 = vmatprep.subr.mxu0 0.0
    %265 = vmatpush1.xpose.msra.mxu0 0.0
    %266 = vmatprep.subr.mxu0 0.0
    %267 = vmatpush1.xpose.msra.mxu0 0.0
    %268 = vmatprep.subr.mxu0 0.0
    %269 = vmatpush1.xpose.msra.mxu0 0.0
    %270 = vmatprep.subr.mxu0 0.0
    %271 = vmatpush1.xpose.msra.mxu0 0.0
    %272 = vmatprep.subr.mxu0 0.0
    %273 = vmatpush1.xpose.msra.mxu0 0.0
    %274 = vmatprep.subr.mxu0 0.0
    %275 = vmatpush1.xpose.msra.mxu0 0.0
    %276 = vmatprep.subr.mxu0 0.0
    %277 = vmatpush1.xpose.msra.mxu0 0.0
    %278 = vmatprep.subr.mxu0 0.0
    %279 = vmatpush1.xpose.msra.mxu0 0.0
    %280 = vmatprep.subr.mxu0 0.0
    %281 = vmatpush1.xpose.msra.mxu0 0.0
    %282 = vmatprep.subr.mxu0 0.0
    %283 = vmatpush1.xpose.msra.mxu0 0.0
    %284 = vmatprep.subr.mxu0 0.0
    %285 = vmatpush1.xpose.msra.mxu0 0.0
    %286 = vmatprep.subr.mxu0 0.0
    %287 = vmatpush1.xpose.msra.mxu0 0.0
    %288 = vmatprep.subr.mxu0 0.0
    %289 = vmatpush1.xpose.msra.mxu0 0.0
    %290 = vmatprep.subr.mxu0 0.0
    %291 = vmatpush1.xpose.msra.mxu0 0.0
    %292 = vmatprep.subr.mxu0 0.0
    %293 = vmatpush1.xpose.msra.mxu0 0.0
    %294 = vmatprep.subr.mxu0 0.0
    %295 = vmatpush1.xpose.msra.mxu0 0.0
    %296 = vmatprep.subr.mxu0 0.0
    %297 = vmatpush1.xpose.msra.mxu0 0.0
    %298 = vmatprep.subr.mxu0 0.0
    %299 = vmatpush1.xpose.msra.mxu0 0.0
    %300 = vmatprep.subr.mxu0 0.0
    %301 = vmatpush1.xpose.msra.mxu0 0.0
    %302 = vmatprep.subr.mxu0 0.0
    %303 = vmatpush1.xpose.msra.mxu0 0.0
    %304 = vmatprep.mubr.f32.mxu0 0.0
    %305 = vmatmul.mubr.f32.gmra.mrb[0].mxu0 %v229
    %v306 = vpop.f32.mrb[0].mxu0
    %v307 = vadd.f32 %v225, %v306
    %v308 = vpop.f32.mrb[0].mxu0
    %309 = vmatprep.mubr.f32.mxu0 0.0
    %310 = vmatmul.mubr.f32.gmra.mrb[0].mxu0 %v232
    %v311 = vpop.f32.mrb[0].mxu0
    %v312 = vadd.f32 %v226, %v311
    %v313 = vpop.f32.mrb[0].mxu0
    %314 = vdwg.mxu0
    %vm315 = vcmask 130048
    %v316 = vsel %vm315, %v307, -inf
    %317 = vmax.xlane.f32.xlu0 %v316
    %v318 = vpop.xlane.xlu0 %317
    %v319 = vsel %vm315, %v312, -inf
    %320 = vmax.xlane.f32.xlu0 %v319
    %v321 = vpop.xlane.xlu0 %320
    %v322 = vsub.f32 %v307, %v318
    %v323 = vsub.f32 %v312, %v321
    %v324 = vmul.f32 %v322, 1.442695
    %v325 = vpow.pop %v324
    %v326 = vmul.f32 %v323, 1.442695
    %v327 = vpow.pop %v326
    %v328 = vsel %vm315, %v325, 0.0
    %329 = vadd.xlane.f32.xlu0 %v328
    %v330 = vpop.xlane.xlu0 %329
    %v331 = vsel %vm315, %v327, 0.0
    %332 = vadd.xlane.f32.xlu0 %v331
    %v333 = vpop.xlane.xlu0 %332
    %v334 = vrcp.pop %v330
    %v335 = vmul.f32 %v325, %v334
    %v336 = vrcp.pop %v333
    %v337 = vmul.f32 %v327, %v336
    %v339 = vsel %vm315, %v335, 0
    %v342 = vsel %vm315, %v337, 0
    %344 = vmatprep.subr.mxu0 0.0
    %345 = vmatpush1.msra.mxu0 %v217
    %346 = vmatprep.subr.mxu0 0.0
    %347 = vmatpush1.msra.mxu0 %v222
    %348 = vmatprep.subr.mxu0 0.0
    %349 = vmatpush1.msra.mxu0 0.0
    %350 = vmatprep.subr.mxu0 0.0
    %351 = vmatpush1.msra.mxu0 0.0
    %352 = vmatprep.subr.mxu0 0.0
    %353 = vmatpush1.msra.mxu0 0.0
    %354 = vmatprep.subr.mxu0 0.0
    %355 = vmatpush1.msra.mxu0 0.0
    %356 = vmatprep.subr.mxu0 0.0
    %357 = vmatpush1.msra.mxu0 0.0
    %358 = vmatprep.subr.mxu0 0.0
    %359 = vmatpush1.msra.mxu0 0.0
    %360 = vmatprep.subr.mxu0 0.0
    %361 = vmatpush1.msra.mxu0 0.0
    %362 = vmatprep.subr.mxu0 0.0
    %363 = vmatpush1.msra.mxu0 0.0
    %364 = vmatprep.subr.mxu0 0.0
    %365 = vmatpush1.msra.mxu0 0.0
    %366 = vmatprep.subr.mxu0 0.0
    %367 = vmatpush1.msra.mxu0 0.0
    %368 = vmatprep.subr.mxu0 0.0
    %369 = vmatpush1.msra.mxu0 0.0
    %370 = vmatprep.subr.mxu0 0.0
    %371 = vmatpush1.msra.mxu0 0.0
    %372 = vmatprep.subr.mxu0 0.0
    %373 = vmatpush1.msra.mxu0 0.0
    %374 = vmatprep.subr.mxu0 0.0
    %375 = vmatpush1.msra.mxu0 0.0
    %376 = vmatprep.subr.mxu0 0.0
    %377 = vmatpush1.msra.mxu0 0.0
    %378 = vmatprep.subr.mxu0 0.0
    %379 = vmatpush1.msra.mxu0 0.0
    %380 = vmatprep.subr.mxu0 0.0
    %381 = vmatpush1.msra.mxu0 0.0
    %382 = vmatprep.subr.mxu0 0.0
    %383 = vmatpush1.msra.mxu0 0.0
    %384 = vmatprep.subr.mxu0 0.0
    %385 = vmatpush1.msra.mxu0 0.0
    %386 = vmatprep.subr.mxu0 0.0
    %387 = vmatpush1.msra.mxu0 0.0
    %388 = vmatprep.subr.mxu0 0.0
    %389 = vmatpush1.msra.mxu0 0.0
    %390 = vmatprep.subr.mxu0 0.0
    %391 = vmatpush1.msra.mxu0 0.0
    %392 = vmatprep.subr.mxu0 0.0
    %393 = vmatpush1.msra.mxu0 0.0
    %394 = vmatprep.subr.mxu0 0.0
    %395 = vmatpush1.msra.mxu0 0.0
    %396 = vmatprep.subr.mxu0 0.0
    %397 = vmatpush1.msra.mxu0 0.0
    %398 = vmatprep.subr.mxu0 0.0
    %399 = vmatpush1.msra.mxu0 0.0
    %400 = vmatprep.subr.mxu0 0.0
    %401 = vmatpush1.msra.mxu0 0.0
    %402 = vmatprep.subr.mxu0 0.0
    %403 = vmatpush1.msra.mxu0 0.0
    %404 = vmatprep.subr.mxu0 0.0
    %405 = vmatpush1.msra.mxu0 0.0
    %406 = vmatprep.subr.mxu0 0.0
    %407 = vmatpush1.msra.mxu0 0.0
    %408 = vmatprep.mubr.f32.mxu0 0.0
    %409 = vmatmul.mubr.f32.gmra.mrb[0].mxu0 %v339
    %v410 = vpop.f32.mrb[0].mxu0
    %v411 = vadd.f32 0.0, %v410
    %v412 = vpop.f32.mrb[0].mxu0
    %413 = vmatprep.mubr.f32.mxu0 0.0
    %414 = vmatmul.mubr.f32.gmra.mrb[0].mxu0 %v342
    %v415 = vpop.f32.mrb[0].mxu0
    %v416 = vadd.f32 0.0, %v415
    %v417 = vpop.f32.mrb[0].mxu0
    %418 = vdwg.mxu0
    %419 = vrot.lane.b32.xlu0 %v140, 120
    %v420 = vpop.permute.xlu0 %419
    %421 = vrot.lane.b32.xlu0 %v146, 120
    %v422 = vpop.permute.xlu0 %421
    %423 = vrot.lane.b32.xlu0 %v142, 120
    %v424 = vpop.permute.xlu0 %423
    %425 = vrot.lane.b32.xlu0 %v148, 120
    %v426 = vpop.permute.xlu0 %425
    %v427 = vsel %vm227, %v420, 0
    %v429 = vsel %vm227, %v422, 0
    %v431 = vsel %vm227, %v424, 0
    %v433 = vsel %vm227, %v426, 0
    %435 = vmatprep.subr.mxu0 0.0
    %436 = vmatpush1.xpose.msra.mxu0 %v431
    %437 = vmatprep.subr.mxu0 0.0
    %438 = vmatpush1.xpose.msra.mxu0 %v433
    %439 = vmatprep.subr.mxu0 0.0
    %440 = vmatpush1.xpose.msra.mxu0 0.0
    %441 = vmatprep.subr.mxu0 0.0
    %442 = vmatpush1.xpose.msra.mxu0 0.0
    %443 = vmatprep.subr.mxu0 0.0
    %444 = vmatpush1.xpose.msra.mxu0 0.0
    %445 = vmatprep.subr.mxu0 0.0
    %446 = vmatpush1.xpose.msra.mxu0 0.0
    %447 = vmatprep.subr.mxu0 0.0
    %448 = vmatpush1.xpose.msra.mxu0 0.0
    %449 = vmatprep.subr.mxu0 0.0
    %450 = vmatpush1.xpose.msra.mxu0 0.0
    %451 = vmatprep.subr.mxu0 0.0
    %452 = vmatpush1.xpose.msra.mxu0 0.0
    %453 = vmatprep.subr.mxu0 0.0
    %454 = vmatpush1.xpose.msra.mxu0 0.0
    %455 = vmatprep.subr.mxu0 0.0
    %456 = vmatpush1.xpose.msra.mxu0 0.0
    %457 = vmatprep.subr.mxu0 0.0
    %458 = vmatpush1.xpose.msra.mxu0 0.0
    %459 = vmatprep.subr.mxu0 0.0
    %460 = vmatpush1.xpose.msra.mxu0 0.0
    %461 = vmatprep.subr.mxu0 0.0
    %462 = vmatpush1.xpose.msra.mxu0 0.0
    %463 = vmatprep.subr.mxu0 0.0
    %464 = vmatpush1.xpose.msra.mxu0 0.0
    %465 = vmatprep.subr.mxu0 0.0
    %466 = vmatpush1.xpose.msra.mxu0 0.0
    %467 = vmatprep.subr.mxu0 0.0
    %468 = vmatpush1.xpose.msra.mxu0 0.0
    %469 = vmatprep.subr.mxu0 0.0
    %470 = vmatpush1.xpose.msra.mxu0 0.0
    %471 = vmatprep.subr.mxu0 0.0
    %472 = vmatpush1.xpose.msra.mxu0 0.0
    %473 = vmatprep.subr.mxu0 0.0
    %474 = vmatpush1.xpose.msra.mxu0 0.0
    %475 = vmatprep.subr.mxu0 0.0
    %476 = vmatpush1.xpose.msra.mxu0 0.0
    %477 = vmatprep.subr.mxu0 0.0
    %478 = vmatpush1.xpose.msra.mxu0 0.0
    %479 = vmatprep.subr.mxu0 0.0
    %480 = vmatpush1.xpose.msra.mxu0 0.0
    %481 = vmatprep.subr.mxu0 0.0
    %482 = vmatpush1.xpose.msra.mxu0 0.0
    %483 = vmatprep.subr.mxu0 0.0
    %484 = vmatpush1.xpose.msra.mxu0 0.0
    %485 = vmatprep.subr.mxu0 0.0
    %486 = vmatpush1.xpose.msra.mxu0 0.0
    %487 = vmatprep.subr.mxu0 0.0
    %488 = vmatpush1.xpose.msra.mxu0 0.0
    %489 = vmatprep.subr.mxu0 0.0
    %490 = vmatpush1.xpose.msra.mxu0 0.0
    %491 = vmatprep.subr.mxu0 0.0
    %492 = vmatpush1.xpose.msra.mxu0 0.0
    %493 = vmatprep.subr.mxu0 0.0
    %494 = vmatpush1.xpose.msra.mxu0 0.0
    %495 = vmatprep.subr.mxu0 0.0
    %496 = vmatpush1.xpose.msra.mxu0 0.0
    %497 = vmatprep.subr.mxu0 0.0
    %498 = vmatpush1.xpose.msra.mxu0 0.0
    %499 = vmatprep.mubr.f32.mxu0 0.0
    %500 = vmatmul.mubr.f32.gmra.mrb[0].mxu0 %v427
    %v501 = vpop.f32.mrb[0].mxu0
    %v502 = vadd.f32 %v225, %v501
    %v503 = vpop.f32.mrb[0].mxu0
    %504 = vmatprep.mubr.f32.mxu0 0.0
    %505 = vmatmul.mubr.f32.gmra.mrb[0].mxu0 %v429
    %v506 = vpop.f32.mrb[0].mxu0
    %v507 = vadd.f32 %v226, %v506
    %v508 = vpop.f32.mrb[0].mxu0
    %509 = vdwg.mxu0
    %v510 = vsel %vm315, %v502, -inf
    %511 = vmax.xlane.f32.xlu0 %v510
    %v512 = vpop.xlane.xlu0 %511
    %v513 = vsel %vm315, %v507, -inf
    %514 = vmax.xlane.f32.xlu0 %v513
    %v515 = vpop.xlane.xlu0 %514
    %v516 = vsub.f32 %v502, %v512
    %v517 = vsub.f32 %v507, %v515
    %v518 = vmul.f32 %v516, 1.442695
    %v519 = vpow.pop %v518
    %v520 = vmul.f32 %v517, 1.442695
    %v521 = vpow.pop %v520
    %v522 = vsel %vm315, %v519, 0.0
    %523 = vadd.xlane.f32.xlu0 %v522
    %v524 = vpop.xlane.xlu0 %523
    %v525 = vsel %vm315, %v521, 0.0
    %526 = vadd.xlane.f32.xlu0 %v525
    %v527 = vpop.xlane.xlu0 %526
    %v528 = vrcp.pop %v524
    %v529 = vmul.f32 %v519, %v528
    %v530 = vrcp.pop %v527
    %v531 = vmul.f32 %v521, %v530
    %534 = vrot.lane.b32.xlu0 %v217, 120
    %v535 = vpop.permute.xlu0 %534
    %536 = vrot.lane.b32.xlu0 %v222, 120
    %v537 = vpop.permute.xlu0 %536
    %v541 = vsel %vm315, %v529, 0
    %v544 = vsel %vm315, %v531, 0
    %546 = vmatprep.subr.mxu0 0.0
    %547 = vmatpush1.msra.mxu0 %v535
    %548 = vmatprep.subr.mxu0 0.0
    %549 = vmatpush1.msra.mxu0 %v537
    %550 = vmatprep.subr.mxu0 0.0
    %551 = vmatpush1.msra.mxu0 0.0
    %552 = vmatprep.subr.mxu0 0.0
    %553 = vmatpush1.msra.mxu0 0.0
    %554 = vmatprep.subr.mxu0 0.0
    %555 = vmatpush1.msra.mxu0 0.0
    %556 = vmatprep.subr.mxu0 0.0
    %557 = vmatpush1.msra.mxu0 0.0
    %558 = vmatprep.subr.mxu0 0.0
    %559 = vmatpush1.msra.mxu0 0.0
    %560 = vmatprep.subr.mxu0 0.0
    %561 = vmatpush1.msra.mxu0 0.0
    %562 = vmatprep.subr.mxu0 0.0
    %563 = vmatpush1.msra.mxu0 0.0
    %564 = vmatprep.subr.mxu0 0.0
    %565 = vmatpush1.msra.mxu0 0.0
    %566 = vmatprep.subr.mxu0 0.0
    %567 = vmatpush1.msra.mxu0 0.0
    %568 = vmatprep.subr.mxu0 0.0
    %569 = vmatpush1.msra.mxu0 0.0
    %570 = vmatprep.subr.mxu0 0.0
    %571 = vmatpush1.msra.mxu0 0.0
    %572 = vmatprep.subr.mxu0 0.0
    %573 = vmatpush1.msra.mxu0 0.0
    %574 = vmatprep.subr.mxu0 0.0
    %575 = vmatpush1.msra.mxu0 0.0
    %576 = vmatprep.subr.mxu0 0.0
    %577 = vmatpush1.msra.mxu0 0.0
    %578 = vmatprep.subr.mxu0 0.0
    %579 = vmatpush1.msra.mxu0 0.0
    %580 = vmatprep.subr.mxu0 0.0
    %581 = vmatpush1.msra.mxu0 0.0
    %582 = vmatprep.subr.mxu0 0.0
    %583 = vmatpush1.msra.mxu0 0.0
    %584 = vmatprep.subr.mxu0 0.0
    %585 = vmatpush1.msra.mxu0 0.0
    %586 = vmatprep.subr.mxu0 0.0
    %587 = vmatpush1.msra.mxu0 0.0
    %588 = vmatprep.subr.mxu0 0.0
    %589 = vmatpush1.msra.mxu0 0.0
    %590 = vmatprep.subr.mxu0 0.0
    %591 = vmatpush1.msra.mxu0 0.0
    %592 = vmatprep.subr.mxu0 0.0
    %593 = vmatpush1.msra.mxu0 0.0
    %594 = vmatprep.subr.mxu0 0.0
    %595 = vmatpush1.msra.mxu0 0.0
    %596 = vmatprep.subr.mxu0 0.0
    %597 = vmatpush1.msra.mxu0 0.0
    %598 = vmatprep.subr.mxu0 0.0
    %599 = vmatpush1.msra.mxu0 0.0
    %600 = vmatprep.subr.mxu0 0.0
    %601 = vmatpush1.msra.mxu0 0.0
    %602 = vmatprep.subr.mxu0 0.0
    %603 = vmatpush1.msra.mxu0 0.0
    %604 = vmatprep.subr.mxu0 0.0
    %605 = vmatpush1.msra.mxu0 0.0
    %606 = vmatprep.subr.mxu0 0.0
    %607 = vmatpush1.msra.mxu0 0.0
    %608 = vmatprep.subr.mxu0 0.0
    %609 = vmatpush1.msra.mxu0 0.0
    %610 = vmatprep.mubr.f32.mxu0 0.0
    %611 = vmatmul.mubr.f32.gmra.mrb[0].mxu0 %v541
    %v612 = vpop.f32.mrb[0].mxu0
    %v613 = vadd.f32 0.0, %v612
    %v614 = vpop.f32.mrb[0].mxu0
    %615 = vmatprep.mubr.f32.mxu0 0.0
    %616 = vmatmul.mubr.f32.gmra.mrb[0].mxu0 %v544
    %v617 = vpop.f32.mrb[0].mxu0
    %v618 = vadd.f32 0.0, %v617
    %v619 = vpop.f32.mrb[0].mxu0
    %620 = vdwg.mxu0
    %v622 = vsel %vm227, %v613, 0
    %v625 = vsel %vm227, %v618, 0
    %627 = vmatprep.subr.mxu0 0.0
    %628 = vmatpush1.msra.mxu0 %v27
    %629 = vmatprep.subr.mxu0 0.0
    %630 = vmatpush1.msra.mxu0 0.0
    %631 = vmatprep.subr.mxu0 0.0
    %632 = vmatpush1.msra.mxu0 0.0
    %633 = vmatprep.subr.mxu0 0.0
    %634 = vmatpush1.msra.mxu0 0.0
    %635 = vmatprep.subr.mxu0 0.0
    %636 = vmatpush1.msra.mxu0 0.0
    %637 = vmatprep.subr.mxu0 0.0
    %638 = vmatpush1.msra.mxu0 0.0
    %639 = vmatprep.subr.mxu0 0.0
    %640 = vmatpush1.msra.mxu0 0.0
    %641 = vmatprep.subr.mxu0 0.0
    %642 = vmatpush1.msra.mxu0 0.0
    %643 = vmatprep.subr.mxu0 0.0
    %644 = vmatpush1.msra.mxu0 0.0
    %645 = vmatprep.subr.mxu0 0.0
    %646 = vmatpush1.msra.mxu0 0.0
    %647 = vmatprep.subr.mxu0 0.0
    %648 = vmatpush1.msra.mxu0 0.0
    %649 = vmatprep.subr.mxu0 0.0
    %650 = vmatpush1.msra.mxu0 0.0
    %651 = vmatprep.subr.mxu0 0.0
    %652 = vmatpush1.msra.mxu0 0.0
    %653 = vmatprep.subr.mxu0 0.0
    %654 = vmatpush1.msra.mxu0 0.0
    %655 = vmatprep.subr.mxu0 0.0
    %656 = vmatpush1.msra.mxu0 0.0
    %657 = vmatprep.subr.mxu0 0.0
    %658 = vmatpush1.msra.mxu0 0.0
    %659 = vmatprep.subr.mxu0 0.0
    %660 = vmatpush1.msra.mxu0 0.0
    %661 = vmatprep.subr.mxu0 0.0
    %662 = vmatpush1.msra.mxu0 0.0
    %663 = vmatprep.subr.mxu0 0.0
    %664 = vmatpush1.msra.mxu0 0.0
    %665 = vmatprep.subr.mxu0 0.0
    %666 = vmatpush1.msra.mxu0 0.0
    %667 = vmatprep.subr.mxu0 0.0
    %668 = vmatpush1.msra.mxu0 0.0
    %669 = vmatprep.subr.mxu0 0.0
    %670 = vmatpush1.msra.mxu0 0.0
    %671 = vmatprep.subr.mxu0 0.0
    %672 = vmatpush1.msra.mxu0 0.0
    %673 = vmatprep.subr.mxu0 0.0
    %674 = vmatpush1.msra.mxu0 0.0
    %675 = vmatprep.subr.mxu0 0.0
    %676 = vmatpush1.msra.mxu0 0.0
    %677 = vmatprep.subr.mxu0 0.0
    %678 = vmatpush1.msra.mxu0 0.0
    %679 = vmatprep.subr.mxu0 0.0
    %680 = vmatpush1.msra.mxu0 0.0
    %681 = vmatprep.subr.mxu0 0.0
    %682 = vmatpush1.msra.mxu0 0.0
    %683 = vmatprep.subr.mxu0 0.0
    %684 = vmatpush1.msra.mxu0 0.0
    %685 = vmatprep.subr.mxu0 0.0
    %686 = vmatpush1.msra.mxu0 0.0
    %687 = vmatprep.subr.mxu0 0.0
    %688 = vmatpush1.msra.mxu0 0.0
    %689 = vmatprep.subr.mxu0 0.0
    %690 = vmatpush1.msra.mxu0 0.0
    %691 = vmatprep.mubr.f32.mxu0 0.0
    %692 = vmatmul.mubr.f32.gmra.mrb[0].mxu0 %v622
    %v693 = vpop.f32.mrb[0].mxu0
    %v694 = vadd.f32 0.0, %v693
    %v695 = vpop.f32.mrb[0].mxu0
    %696 = vmatprep.mubr.f32.mxu0 0.0
    %697 = vmatmul.mubr.f32.gmra.mrb[0].mxu0 %v625
    %v698 = vpop.f32.mrb[0].mxu0
    %v699 = vadd.f32 0.0, %v698
    %v700 = vpop.f32.mrb[0].mxu0
    %701 = vdwg.mxu0
    %v703 = vsel %vm227, %v411, 0
    %v706 = vsel %vm227, %v416, 0
    %708 = vmatprep.subr.mxu0 0.0
    %709 = vmatpush1.msra.mxu0 %v26
    %710 = vmatprep.subr.mxu0 0.0
    %711 = vmatpush1.msra.mxu0 0.0
    %712 = vmatprep.subr.mxu0 0.0
    %713 = vmatpush1.msra.mxu0 0.0
    %714 = vmatprep.subr.mxu0 0.0
    %715 = vmatpush1.msra.mxu0 0.0
    %716 = vmatprep.subr.mxu0 0.0
    %717 = vmatpush1.msra.mxu0 0.0
    %718 = vmatprep.subr.mxu0 0.0
    %719 = vmatpush1.msra.mxu0 0.0
    %720 = vmatprep.subr.mxu0 0.0
    %721 = vmatpush1.msra.mxu0 0.0
    %722 = vmatprep.subr.mxu0 0.0
    %723 = vmatpush1.msra.mxu0 0.0
    %724 = vmatprep.subr.mxu0 0.0
    %725 = vmatpush1.msra.mxu0 0.0
    %726 = vmatprep.subr.mxu0 0.0
    %727 = vmatpush1.msra.mxu0 0.0
    %728 = vmatprep.subr.mxu0 0.0
    %729 = vmatpush1.msra.mxu0 0.0
    %730 = vmatprep.subr.mxu0 0.0
    %731 = vmatpush1.msra.mxu0 0.0
    %732 = vmatprep.subr.mxu0 0.0
    %733 = vmatpush1.msra.mxu0 0.0
    %734 = vmatprep.subr.mxu0 0.0
    %735 = vmatpush1.msra.mxu0 0.0
    %736 = vmatprep.subr.mxu0 0.0
    %737 = vmatpush1.msra.mxu0 0.0
    %738 = vmatprep.subr.mxu0 0.0
    %739 = vmatpush1.msra.mxu0 0.0
    %740 = vmatprep.subr.mxu0 0.0
    %741 = vmatpush1.msra.mxu0 0.0
    %742 = vmatprep.subr.mxu0 0.0
    %743 = vmatpush1.msra.mxu0 0.0
    %744 = vmatprep.subr.mxu0 0.0
    %745 = vmatpush1.msra.mxu0 0.0
    %746 = vmatprep.subr.mxu0 0.0
    %747 = vmatpush1.msra.mxu0 0.0
    %748 = vmatprep.subr.mxu0 0.0
    %749 = vmatpush1.msra.mxu0 0.0
    %750 = vmatprep.subr.mxu0 0.0
    %751 = vmatpush1.msra.mxu0 0.0
    %752 = vmatprep.subr.mxu0 0.0
    %753 = vmatpush1.msra.mxu0 0.0
    %754 = vmatprep.subr.mxu0 0.0
    %755 = vmatpush1.msra.mxu0 0.0
    %756 = vmatprep.subr.mxu0 0.0
    %757 = vmatpush1.msra.mxu0 0.0
    %758 = vmatprep.subr.mxu0 0.0
    %759 = vmatpush1.msra.mxu0 0.0
    %760 = vmatprep.subr.mxu0 0.0
    %761 = vmatpush1.msra.mxu0 0.0
    %762 = vmatprep.subr.mxu0 0.0
    %763 = vmatpush1.msra.mxu0 0.0
    %764 = vmatprep.subr.mxu0 0.0
    %765 = vmatpush1.msra.mxu0 0.0
    %766 = vmatprep.subr.mxu0 0.0
    %767 = vmatpush1.msra.mxu0 0.0
    %768 = vmatprep.subr.mxu0 0.0
    %769 = vmatpush1.msra.mxu0 0.0
    %770 = vmatprep.subr.mxu0 0.0
    %771 = vmatpush1.msra.mxu0 0.0
    %772 = vmatprep.mubr.f32.mxu0 0.0
    %773 = vmatmul.mubr.f32.gmra.mrb[0].mxu0 %v703
    %v774 = vpop.f32.mrb[0].mxu0
    %v775 = vadd.f32 %v694, %v774
    %v776 = vpop.f32.mrb[0].mxu0
    %777 = vmatprep.mubr.f32.mxu0 0.0
    %778 = vmatmul.mubr.f32.gmra.mrb[0].mxu0 %v706
    %v779 = vpop.f32.mrb[0].mxu0
    %v780 = vadd.f32 %v699, %v779
    %v781 = vpop.f32.mrb[0].mxu0
    %782 = vdwg.mxu0
    %783 = vrot.lane.b32.xlu0 %v140, 112
    %v784 = vpop.permute.xlu0 %783
    %785 = vrot.lane.b32.xlu0 %v146, 112
    %v786 = vpop.permute.xlu0 %785
    %787 = vrot.lane.b32.xlu0 %v142, 112
    %v788 = vpop.permute.xlu0 %787
    %789 = vrot.lane.b32.xlu0 %v148, 112
    %v790 = vpop.permute.xlu0 %789
    %v791 = vsel %vm227, %v784, 0
    %v793 = vsel %vm227, %v786, 0
    %v795 = vsel %vm227, %v788, 0
    %v797 = vsel %vm227, %v790, 0
    %799 = vmatprep.subr.mxu0 0.0
    %800 = vmatpush1.xpose.msra.mxu0 %v795
    %801 = vmatprep.subr.mxu0 0.0
    %802 = vmatpush1.xpose.msra.mxu0 %v797
    %803 = vmatprep.subr.mxu0 0.0
    %804 = vmatpush1.xpose.msra.mxu0 0.0
    %805 = vmatprep.subr.mxu0 0.0
    %806 = vmatpush1.xpose.msra.mxu0 0.0
    %807 = vmatprep.subr.mxu0 0.0
    %808 = vmatpush1.xpose.msra.mxu0 0.0
    %809 = vmatprep.subr.mxu0 0.0
    %810 = vmatpush1.xpose.msra.mxu0 0.0
    %811 = vmatprep.subr.mxu0 0.0
    %812 = vmatpush1.xpose.msra.mxu0 0.0
    %813 = vmatprep.subr.mxu0 0.0
    %814 = vmatpush1.xpose.msra.mxu0 0.0
    %815 = vmatprep.subr.mxu0 0.0
    %816 = vmatpush1.xpose.msra.mxu0 0.0
    %817 = vmatprep.subr.mxu0 0.0
    %818 = vmatpush1.xpose.msra.mxu0 0.0
    %819 = vmatprep.subr.mxu0 0.0
    %820 = vmatpush1.xpose.msra.mxu0 0.0
    %821 = vmatprep.subr.mxu0 0.0
    %822 = vmatpush1.xpose.msra.mxu0 0.0
    %823 = vmatprep.subr.mxu0 0.0
    %824 = vmatpush1.xpose.msra.mxu0 0.0
    %825 = vmatprep.subr.mxu0 0.0
    %826 = vmatpush1.xpose.msra.mxu0 0.0
    %827 = vmatprep.subr.mxu0 0.0
    %828 = vmatpush1.xpose.msra.mxu0 0.0
    %829 = vmatprep.subr.mxu0 0.0
    %830 = vmatpush1.xpose.msra.mxu0 0.0
    %831 = vmatprep.subr.mxu0 0.0
    %832 = vmatpush1.xpose.msra.mxu0 0.0
    %833 = vmatprep.subr.mxu0 0.0
    %834 = vmatpush1.xpose.msra.mxu0 0.0
    %835 = vmatprep.subr.mxu0 0.0
    %836 = vmatpush1.xpose.msra.mxu0 0.0
    %837 = vmatprep.subr.mxu0 0.0
    %838 = vmatpush1.xpose.msra.mxu0 0.0
    %839 = vmatprep.subr.mxu0 0.0
    %840 = vmatpush1.xpose.msra.mxu0 0.0
    %841 = vmatprep.subr.mxu0 0.0
    %842 = vmatpush1.xpose.msra.mxu0 0.0
    %843 = vmatprep.subr.mxu0 0.0
    %844 = vmatpush1.xpose.msra.mxu0 0.0
    %845 = vmatprep.subr.mxu0 0.0
    %846 = vmatpush1.xpose.msra.mxu0 0.0
    %847 = vmatprep.subr.mxu0 0.0
    %848 = vmatpush1.xpose.msra.mxu0 0.0
    %849 = vmatprep.subr.mxu0 0.0
    %850 = vmatpush1.xpose.msra.mxu0 0.0
    %851 = vmatprep.subr.mxu0 0.0
    %852 = vmatpush1.xpose.msra.mxu0 0.0
    %853 = vmatprep.subr.mxu0 0.0
    %854 = vmatpush1.xpose.msra.mxu0 0.0
    %855 = vmatprep.subr.mxu0 0.0
    %856 = vmatpush1.xpose.msra.mxu0 0.0
    %857 = vmatprep.subr.mxu0 0.0
    %858 = vmatpush1.xpose.msra.mxu0 0.0
    %859 = vmatprep.subr.mxu0 0.0
    %860 = vmatpush1.xpose.msra.mxu0 0.0
    %861 = vmatprep.subr.mxu0 0.0
    %862 = vmatpush1.xpose.msra.mxu0 0.0
    %863 = vmatprep.mubr.f32.mxu0 0.0
    %864 = vmatmul.mubr.f32.gmra.mrb[0].mxu0 %v791
    %v865 = vpop.f32.mrb[0].mxu0
    %v866 = vadd.f32 %v225, %v865
    %v867 = vpop.f32.mrb[0].mxu0
    %868 = vmatprep.mubr.f32.mxu0 0.0
    %869 = vmatmul.mubr.f32.gmra.mrb[0].mxu0 %v793
    %v870 = vpop.f32.mrb[0].mxu0
    %v871 = vadd.f32 %v226, %v870
    %v872 = vpop.f32.mrb[0].mxu0
    %873 = vdwg.mxu0
    %v874 = vsel %vm315, %v866, -inf
    %875 = vmax.xlane.f32.xlu0 %v874
    %v876 = vpop.xlane.xlu0 %875
    %v877 = vsel %vm315, %v871, -inf
    %878 = vmax.xlane.f32.xlu0 %v877
    %v879 = vpop.xlane.xlu0 %878
    %v880 = vsub.f32 %v866, %v876
    %v881 = vsub.f32 %v871, %v879
    %v882 = vmul.f32 %v880, 1.442695
    %v883 = vpow.pop %v882
    %v884 = vmul.f32 %v881, 1.442695
    %v885 = vpow.pop %v884
    %v886 = vsel %vm315, %v883, 0.0
    %887 = vadd.xlane.f32.xlu0 %v886
    %v888 = vpop.xlane.xlu0 %887
    %v889 = vsel %vm315, %v885, 0.0
    %890 = vadd.xlane.f32.xlu0 %v889
    %v891 = vpop.xlane.xlu0 %890
    %v892 = vrcp.pop %v888
    %v893 = vmul.f32 %v883, %v892
    %v894 = vrcp.pop %v891
    %v895 = vmul.f32 %v885, %v894
    %896 = vrot.lane.b32.xlu0 %v217, 112
    %v897 = vpop.permute.xlu0 %896
    %898 = vrot.lane.b32.xlu0 %v222, 112
    %v899 = vpop.permute.xlu0 %898
    %v903 = vsel %vm315, %v893, 0
    %v906 = vsel %vm315, %v895, 0
    %908 = vmatprep.subr.mxu0 0.0
    %909 = vmatpush1.msra.mxu0 %v897
    %910 = vmatprep.subr.mxu0 0.0
    %911 = vmatpush1.msra.mxu0 %v899
    %912 = vmatprep.subr.mxu0 0.0
    %913 = vmatpush1.msra.mxu0 0.0
    %914 = vmatprep.subr.mxu0 0.0
    %915 = vmatpush1.msra.mxu0 0.0
    %916 = vmatprep.subr.mxu0 0.0
    %917 = vmatpush1.msra.mxu0 0.0
    %918 = vmatprep.subr.mxu0 0.0
    %919 = vmatpush1.msra.mxu0 0.0
    %920 = vmatprep.subr.mxu0 0.0
    %921 = vmatpush1.msra.mxu0 0.0
    %922 = vmatprep.subr.mxu0 0.0
    %923 = vmatpush1.msra.mxu0 0.0
    %924 = vmatprep.subr.mxu0 0.0
    %925 = vmatpush1.msra.mxu0 0.0
    %926 = vmatprep.subr.mxu0 0.0
    %927 = vmatpush1.msra.mxu0 0.0
    %928 = vmatprep.subr.mxu0 0.0
    %929 = vmatpush1.msra.mxu0 0.0
    %930 = vmatprep.subr.mxu0 0.0
    %931 = vmatpush1.msra.mxu0 0.0
    %932 = vmatprep.subr.mxu0 0.0
    %933 = vmatpush1.msra.mxu0 0.0
    %934 = vmatprep.subr.mxu0 0.0
    %935 = vmatpush1.msra.mxu0 0.0
    %936 = vmatprep.subr.mxu0 0.0
    %937 = vmatpush1.msra.mxu0 0.0
    %938 = vmatprep.subr.mxu0 0.0
    %939 = vmatpush1.msra.mxu0 0.0
    %940 = vmatprep.subr.mxu0 0.0
    %941 = vmatpush1.msra.mxu0 0.0
    %942 = vmatprep.subr.mxu0 0.0
    %943 = vmatpush1.msra.mxu0 0.0
    %944 = vmatprep.subr.mxu0 0.0
    %945 = vmatpush1.msra.mxu0 0.0
    %946 = vmatprep.subr.mxu0 0.0
    %947 = vmatpush1.msra.mxu0 0.0
    %948 = vmatprep.subr.mxu0 0.0
    %949 = vmatpush1.msra.mxu0 0.0
    %950 = vmatprep.subr.mxu0 0.0
    %951 = vmatpush1.msra.mxu0 0.0
    %952 = vmatprep.subr.mxu0 0.0
    %953 = vmatpush1.msra.mxu0 0.0
    %954 = vmatprep.subr.mxu0 0.0
    %955 = vmatpush1.msra.mxu0 0.0
    %956 = vmatprep.subr.mxu0 0.0
    %957 = vmatpush1.msra.mxu0 0.0
    %958 = vmatprep.subr.mxu0 0.0
    %959 = vmatpush1.msra.mxu0 0.0
    %960 = vmatprep.subr.mxu0 0.0
    %961 = vmatpush1.msra.mxu0 0.0
    %962 = vmatprep.subr.mxu0 0.0
    %963 = vmatpush1.msra.mxu0 0.0
    %964 = vmatprep.subr.mxu0 0.0
    %965 = vmatpush1.msra.mxu0 0.0
    %966 = vmatprep.subr.mxu0 0.0
    %967 = vmatpush1.msra.mxu0 0.0
    %968 = vmatprep.subr.mxu0 0.0
    %969 = vmatpush1.msra.mxu0 0.0
    %970 = vmatprep.subr.mxu0 0.0
    %971 = vmatpush1.msra.mxu0 0.0
    %972 = vmatprep.mubr.f32.mxu0 0.0
    %973 = vmatmul.mubr.f32.gmra.mrb[0].mxu0 %v903
    %v974 = vpop.f32.mrb[0].mxu0
    %v975 = vadd.f32 0.0, %v974
    %v976 = vpop.f32.mrb[0].mxu0
    %977 = vmatprep.mubr.f32.mxu0 0.0
    %978 = vmatmul.mubr.f32.gmra.mrb[0].mxu0 %v906
    %v979 = vpop.f32.mrb[0].mxu0
    %v980 = vadd.f32 0.0, %v979
    %v981 = vpop.f32.mrb[0].mxu0
    %982 = vdwg.mxu0
    %v984 = vsel %vm227, %v975, 0
    %v987 = vsel %vm227, %v980, 0
    %989 = vmatprep.subr.mxu0 0.0
    %990 = vmatpush1.msra.mxu0 %v28
    %991 = vmatprep.subr.mxu0 0.0
    %992 = vmatpush1.msra.mxu0 0.0
    %993 = vmatprep.subr.mxu0 0.0
    %994 = vmatpush1.msra.mxu0 0.0
    %995 = vmatprep.subr.mxu0 0.0
    %996 = vmatpush1.msra.mxu0 0.0
    %997 = vmatprep.subr.mxu0 0.0
    %998 = vmatpush1.msra.mxu0 0.0
    %999 = vmatprep.subr.mxu0 0.0
    %1000 = vmatpush1.msra.mxu0 0.0
    %1001 = vmatprep.subr.mxu0 0.0
    %1002 = vmatpush1.msra.mxu0 0.0
    %1003 = vmatprep.subr.mxu0 0.0
    %1004 = vmatpush1.msra.mxu0 0.0
    %1005 = vmatprep.subr.mxu0 0.0
    %1006 = vmatpush1.msra.mxu0 0.0
    %1007 = vmatprep.subr.mxu0 0.0
    %1008 = vmatpush1.msra.mxu0 0.0
    %1009 = vmatprep.subr.mxu0 0.0
    %1010 = vmatpush1.msra.mxu0 0.0
    %1011 = vmatprep.subr.mxu0 0.0
    %1012 = vmatpush1.msra.mxu0 0.0
    %1013 = vmatprep.subr.mxu0 0.0
    %1014 = vmatpush1.msra.mxu0 0.0
    %1015 = vmatprep.subr.mxu0 0.0
    %1016 = vmatpush1.msra.mxu0 0.0
    %1017 = vmatprep.subr.mxu0 0.0
    %1018 = vmatpush1.msra.mxu0 0.0
    %1019 = vmatprep.subr.mxu0 0.0
    %1020 = vmatpush1.msra.mxu0 0.0
    %1021 = vmatprep.subr.mxu0 0.0
    %1022 = vmatpush1.msra.mxu0 0.0
    %1023 = vmatprep.subr.mxu0 0.0
    %1024 = vmatpush1.msra.mxu0 0.0
    %1025 = vmatprep.subr.mxu0 0.0
    %1026 = vmatpush1.msra.mxu0 0.0
    %1027 = vmatprep.subr.mxu0 0.0
    %1028 = vmatpush1.msra.mxu0 0.0
    %1029 = vmatprep.subr.mxu0 0.0
    %1030 = vmatpush1.msra.mxu0 0.0
    %1031 = vmatprep.subr.mxu0 0.0
    %1032 = vmatpush1.msra.mxu0 0.0
    %1033 = vmatprep.subr.mxu0 0.0
    %1034 = vmatpush1.msra.mxu0 0.0
    %1035 = vmatprep.subr.mxu0 0.0
    %1036 = vmatpush1.msra.mxu0 0.0
    %1037 = vmatprep.subr.mxu0 0.0
    %1038 = vmatpush1.msra.mxu0 0.0
    %1039 = vmatprep.subr.mxu0 0.0
    %1040 = vmatpush1.msra.mxu0 0.0
    %1041 = vmatprep.subr.mxu0 0.0
    %1042 = vmatpush1.msra.mxu0 0.0
    %1043 = vmatprep.subr.mxu0 0.0
    %1044 = vmatpush1.msra.mxu0 0.0
    %1045 = vmatprep.subr.mxu0 0.0
    %1046 = vmatpush1.msra.mxu0 0.0
    %1047 = vmatprep.subr.mxu0 0.0
    %1048 = vmatpush1.msra.mxu0 0.0
    %1049 = vmatprep.subr.mxu0 0.0
    %1050 = vmatpush1.msra.mxu0 0.0
    %1051 = vmatprep.subr.mxu0 0.0
    %1052 = vmatpush1.msra.mxu0 0.0
    %1053 = vmatprep.mubr.f32.mxu0 0.0
    %1054 = vmatmul.mubr.f32.gmra.mrb[0].mxu0 %v984
    %v1055 = vpop.f32.mrb[0].mxu0
    %v1056 = vadd.f32 0.0, %v1055
    %v1057 = vpop.f32.mrb[0].mxu0
    %1058 = vmatprep.mubr.f32.mxu0 0.0
    %1059 = vmatmul.mubr.f32.gmra.mrb[0].mxu0 %v987
    %v1060 = vpop.f32.mrb[0].mxu0
    %v1061 = vadd.f32 0.0, %v1060
    %v1062 = vpop.f32.mrb[0].mxu0
    %1063 = vdwg.mxu0
    %v1064 = vadd.f32 %v775, %v1056
    %v1065 = vadd.f32 %v780, %v1061
    %1066 = vrot.lane.b32.xlu0 %v140, 104
    %v1067 = vpop.permute.xlu0 %1066
    %1068 = vrot.lane.b32.xlu0 %v146, 104
    %v1069 = vpop.permute.xlu0 %1068
    %1070 = vrot.lane.b32.xlu0 %v142, 104
    %v1071 = vpop.permute.xlu0 %1070
    %1072 = vrot.lane.b32.xlu0 %v148, 104
    %v1073 = vpop.permute.xlu0 %1072
    %v1074 = vsel %vm227, %v1067, 0
    %v1076 = vsel %vm227, %v1069, 0
    %v1078 = vsel %vm227, %v1071, 0
    %v1080 = vsel %vm227, %v1073, 0
    %1082 = vmatprep.subr.mxu0 0.0
    %1083 = vmatpush1.xpose.msra.mxu0 %v1078
    %1084 = vmatprep.subr.mxu0 0.0
    %1085 = vmatpush1.xpose.msra.mxu0 %v1080
    %1086 = vmatprep.subr.mxu0 0.0
    %1087 = vmatpush1.xpose.msra.mxu0 0.0
    %1088 = vmatprep.subr.mxu0 0.0
    %1089 = vmatpush1.xpose.msra.mxu0 0.0
    %1090 = vmatprep.subr.mxu0 0.0
    %1091 = vmatpush1.xpose.msra.mxu0 0.0
    %1092 = vmatprep.subr.mxu0 0.0
    %1093 = vmatpush1.xpose.msra.mxu0 0.0
    %1094 = vmatprep.subr.mxu0 0.0
    %1095 = vmatpush1.xpose.msra.mxu0 0.0
    %1096 = vmatprep.subr.mxu0 0.0
    %1097 = vmatpush1.xpose.msra.mxu0 0.0
    %1098 = vmatprep.subr.mxu0 0.0
    %1099 = vmatpush1.xpose.msra.mxu0 0.0
    %1100 = vmatprep.subr.mxu0 0.0
    %1101 = vmatpush1.xpose.msra.mxu0 0.0
    %1102 = vmatprep.subr.mxu0 0.0
    %1103 = vmatpush1.xpose.msra.mxu0 0.0
    %1104 = vmatprep.subr.mxu0 0.0
    %1105 = vmatpush1.xpose.msra.mxu0 0.0
    %1106 = vmatprep.subr.mxu0 0.0
    %1107 = vmatpush1.xpose.msra.mxu0 0.0
    %1108 = vmatprep.subr.mxu0 0.0
    %1109 = vmatpush1.xpose.msra.mxu0 0.0
    %1110 = vmatprep.subr.mxu0 0.0
    %1111 = vmatpush1.xpose.msra.mxu0 0.0
    %1112 = vmatprep.subr.mxu0 0.0
    %1113 = vmatpush1.xpose.msra.mxu0 0.0
    %1114 = vmatprep.subr.mxu0 0.0
    %1115 = vmatpush1.xpose.msra.mxu0 0.0
    %1116 = vmatprep.subr.mxu0 0.0
    %1117 = vmatpush1.xpose.msra.mxu0 0.0
    %1118 = vmatprep.subr.mxu0 0.0
    %1119 = vmatpush1.xpose.msra.mxu0 0.0
    %1120 = vmatprep.subr.mxu0 0.0
    %1121 = vmatpush1.xpose.msra.mxu0 0.0
    %1122 = vmatprep.subr.mxu0 0.0
    %1123 = vmatpush1.xpose.msra.mxu0 0.0
    %1124 = vmatprep.subr.mxu0 0.0
    %1125 = vmatpush1.xpose.msra.mxu0 0.0
    %1126 = vmatprep.subr.mxu0 0.0
    %1127 = vmatpush1.xpose.msra.mxu0 0.0
    %1128 = vmatprep.subr.mxu0 0.0
    %1129 = vmatpush1.xpose.msra.mxu0 0.0
    %1130 = vmatprep.subr.mxu0 0.0
    %1131 = vmatpush1.xpose.msra.mxu0 0.0
    %1132 = vmatprep.subr.mxu0 0.0
    %1133 = vmatpush1.xpose.msra.mxu0 0.0
    %1134 = vmatprep.subr.mxu0 0.0
    %1135 = vmatpush1.xpose.msra.mxu0 0.0
    %1136 = vmatprep.subr.mxu0 0.0
    %1137 = vmatpush1.xpose.msra.mxu0 0.0
    %1138 = vmatprep.subr.mxu0 0.0
    %1139 = vmatpush1.xpose.msra.mxu0 0.0
    %1140 = vmatprep.subr.mxu0 0.0
    %1141 = vmatpush1.xpose.msra.mxu0 0.0
    %1142 = vmatprep.subr.mxu0 0.0
    %1143 = vmatpush1.xpose.msra.mxu0 0.0
    %1144 = vmatprep.subr.mxu0 0.0
    %1145 = vmatpush1.xpose.msra.mxu0 0.0
    %1146 = vmatprep.mubr.f32.mxu0 0.0
    %1147 = vmatmul.mubr.f32.gmra.mrb[0].mxu0 %v1074
    %v1148 = vpop.f32.mrb[0].mxu0
    %v1149 = vadd.f32 %v225, %v1148
    %v1150 = vpop.f32.mrb[0].mxu0
    %1151 = vmatprep.mubr.f32.mxu0 0.0
    %1152 = vmatmul.mubr.f32.gmra.mrb[0].mxu0 %v1076
    %v1153 = vpop.f32.mrb[0].mxu0
    %v1154 = vadd.f32 %v226, %v1153
    %v1155 = vpop.f32.mrb[0].mxu0
    %1156 = vdwg.mxu0
    %v1157 = vsel %vm315, %v1149, -inf
    %1158 = vmax.xlane.f32.xlu0 %v1157
    %v1159 = vpop.xlane.xlu0 %1158
    %v1160 = vsel %vm315, %v1154, -inf
    %1161 = vmax.xlane.f32.xlu0 %v1160
    %v1162 = vpop.xlane.xlu0 %1161
    %v1163 = vsub.f32 %v1149, %v1159
    %v1164 = vsub.f32 %v1154, %v1162
    %v1165 = vmul.f32 %v1163, 1.442695
    %v1166 = vpow.pop %v1165
    %v1167 = vmul.f32 %v1164, 1.442695
    %v1168 = vpow.pop %v1167
    %v1169 = vsel %vm315, %v1166, 0.0
    %1170 = vadd.xlane.f32.xlu0 %v1169
    %v1171 = vpop.xlane.xlu0 %1170
    %v1172 = vsel %vm315, %v1168, 0.0
    %1173 = vadd.xlane.f32.xlu0 %v1172
    %v1174 = vpop.xlane.xlu0 %1173
    %v1175 = vrcp.pop %v1171
    %v1176 = vmul.f32 %v1166, %v1175
    %v1177 = vrcp.pop %v1174
    %v1178 = vmul.f32 %v1168, %v1177
    %1179 = vrot.lane.b32.xlu0 %v217, 104
    %v1180 = vpop.permute.xlu0 %1179
    %1181 = vrot.lane.b32.xlu0 %v222, 104
    %v1182 = vpop.permute.xlu0 %1181
    %v1186 = vsel %vm315, %v1176, 0
    %v1189 = vsel %vm315, %v1178, 0
    %1191 = vmatprep.subr.mxu0 0.0
    %1192 = vmatpush1.msra.mxu0 %v1180
    %1193 = vmatprep.subr.mxu0 0.0
    %1194 = vmatpush1.msra.mxu0 %v1182
    %1195 = vmatprep.subr.mxu0 0.0
    %1196 = vmatpush1.msra.mxu0 0.0
    %1197 = vmatprep.subr.mxu0 0.0
    %1198 = vmatpush1.msra.mxu0 0.0
    %1199 = vmatprep.subr.mxu0 0.0
    %1200 = vmatpush1.msra.mxu0 0.0
    %1201 = vmatprep.subr.mxu0 0.0
    %1202 = vmatpush1.msra.mxu0 0.0
    %1203 = vmatprep.subr.mxu0 0.0
    %1204 = vmatpush1.msra.mxu0 0.0
    %1205 = vmatprep.subr.mxu0 0.0
    %1206 = vmatpush1.msra.mxu0 0.0
    %1207 = vmatprep.subr.mxu0 0.0
    %1208 = vmatpush1.msra.mxu0 0.0
    %1209 = vmatprep.subr.mxu0 0.0
    %1210 = vmatpush1.msra.mxu0 0.0
    %1211 = vmatprep.subr.mxu0 0.0
    %1212 = vmatpush1.msra.mxu0 0.0
    %1213 = vmatprep.subr.mxu0 0.0
    %1214 = vmatpush1.msra.mxu0 0.0
    %1215 = vmatprep.subr.mxu0 0.0
    %1216 = vmatpush1.msra.mxu0 0.0
    %1217 = vmatprep.subr.mxu0 0.0
    %1218 = vmatpush1.msra.mxu0 0.0
    %1219 = vmatprep.subr.mxu0 0.0
    %1220 = vmatpush1.msra.mxu0 0.0
    %1221 = vmatprep.subr.mxu0 0.0
    %1222 = vmatpush1.msra.mxu0 0.0
    %1223 = vmatprep.subr.mxu0 0.0
    %1224 = vmatpush1.msra.mxu0 0.0
    %1225 = vmatprep.subr.mxu0 0.0
    %1226 = vmatpush1.msra.mxu0 0.0
    %1227 = vmatprep.subr.mxu0 0.0
    %1228 = vmatpush1.msra.mxu0 0.0
    %1229 = vmatprep.subr.mxu0 0.0
    %1230 = vmatpush1.msra.mxu0 0.0
    %1231 = vmatprep.subr.mxu0 0.0
    %1232 = vmatpush1.msra.mxu0 0.0
    %1233 = vmatprep.subr.mxu0 0.0
    %1234 = vmatpush1.msra.mxu0 0.0
    %1235 = vmatprep.subr.mxu0 0.0
    %1236 = vmatpush1.msra.mxu0 0.0
    %1237 = vmatprep.subr.mxu0 0.0
    %1238 = vmatpush1.msra.mxu0 0.0
    %1239 = vmatprep.subr.mxu0 0.0
    %1240 = vmatpush1.msra.mxu0 0.0
    %1241 = vmatprep.subr.mxu0 0.0
    %1242 = vmatpush1.msra.mxu0 0.0
    %1243 = vmatprep.subr.mxu0 0.0
    %1244 = vmatpush1.msra.mxu0 0.0
    %1245 = vmatprep.subr.mxu0 0.0
    %1246 = vmatpush1.msra.mxu0 0.0
    %1247 = vmatprep.subr.mxu0 0.0
    %1248 = vmatpush1.msra.mxu0 0.0
    %1249 = vmatprep.subr.mxu0 0.0
    %1250 = vmatpush1.msra.mxu0 0.0
    %1251 = vmatprep.subr.mxu0 0.0
    %1252 = vmatpush1.msra.mxu0 0.0
    %1253 = vmatprep.subr.mxu0 0.0
    %1254 = vmatpush1.msra.mxu0 0.0
    %1255 = vmatprep.mubr.f32.mxu0 0.0
    %1256 = vmatmul.mubr.f32.gmra.mrb[0].mxu0 %v1186
    %v1257 = vpop.f32.mrb[0].mxu0
    %v1258 = vadd.f32 0.0, %v1257
    %v1259 = vpop.f32.mrb[0].mxu0
    %1260 = vmatprep.mubr.f32.mxu0 0.0
    %1261 = vmatmul.mubr.f32.gmra.mrb[0].mxu0 %v1189
    %v1262 = vpop.f32.mrb[0].mxu0
    %v1263 = vadd.f32 0.0, %v1262
    %v1264 = vpop.f32.mrb[0].mxu0
    %1265 = vdwg.mxu0
    %v1267 = vsel %vm227, %v1258, 0
    %v1270 = vsel %vm227, %v1263, 0
    %1272 = vmatprep.subr.mxu0 0.0
    %1273 = vmatpush1.msra.mxu0 %v29
    %1274 = vmatprep.subr.mxu0 0.0
    %1275 = vmatpush1.msra.mxu0 0.0
    %1276 = vmatprep.subr.mxu0 0.0
    %1277 = vmatpush1.msra.mxu0 0.0
    %1278 = vmatprep.subr.mxu0 0.0
    %1279 = vmatpush1.msra.mxu0 0.0
    %1280 = vmatprep.subr.mxu0 0.0
    %1281 = vmatpush1.msra.mxu0 0.0
    %1282 = vmatprep.subr.mxu0 0.0
    %1283 = vmatpush1.msra.mxu0 0.0
    %1284 = vmatprep.subr.mxu0 0.0
    %1285 = vmatpush1.msra.mxu0 0.0
    %1286 = vmatprep.subr.mxu0 0.0
    %1287 = vmatpush1.msra.mxu0 0.0
    %1288 = vmatprep.subr.mxu0 0.0
    %1289 = vmatpush1.msra.mxu0 0.0
    %1290 = vmatprep.subr.mxu0 0.0
    %1291 = vmatpush1.msra.mxu0 0.0
    %1292 = vmatprep.subr.mxu0 0.0
    %1293 = vmatpush1.msra.mxu0 0.0
    %1294 = vmatprep.subr.mxu0 0.0
    %1295 = vmatpush1.msra.mxu0 0.0
    %1296 = vmatprep.subr.mxu0 0.0
    %1297 = vmatpush1.msra.mxu0 0.0
    %1298 = vmatprep.subr.mxu0 0.0
    %1299 = vmatpush1.msra.mxu0 0.0
    %1300 = vmatprep.subr.mxu0 0.0
    %1301 = vmatpush1.msra.mxu0 0.0
    %1302 = vmatprep.subr.mxu0 0.0
    %1303 = vmatpush1.msra.mxu0 0.0
    %1304 = vmatprep.subr.mxu0 0.0
    %1305 = vmatpush1.msra.mxu0 0.0
    %1306 = vmatprep.subr.mxu0 0.0
    %1307 = vmatpush1.msra.mxu0 0.0
    %1308 = vmatprep.subr.mxu0 0.0
    %1309 = vmatpush1.msra.mxu0 0.0
    %1310 = vmatprep.subr.mxu0 0.0
    %1311 = vmatpush1.msra.mxu0 0.0
    %1312 = vmatprep.subr.mxu0 0.0
    %1313 = vmatpush1.msra.mxu0 0.0
    %1314 = vmatprep.subr.mxu0 0.0
    %1315 = vmatpush1.msra.mxu0 0.0
    %1316 = vmatprep.subr.mxu0 0.0
    %1317 = vmatpush1.msra.mxu0 0.0
    %1318 = vmatprep.subr.mxu0 0.0
    %1319 = vmatpush1.msra.mxu0 0.0
    %1320 = vmatprep.subr.mxu0 0.0
    %1321 = vmatpush1.msra.mxu0 0.0
    %1322 = vmatprep.subr.mxu0 0.0
    %1323 = vmatpush1.msra.mxu0 0.0
    %1324 = vmatprep.subr.mxu0 0.0
    %1325 = vmatpush1.msra.mxu0 0.0
    %1326 = vmatprep.subr.mxu0 0.0
    %1327 = vmatpush1.msra.mxu0 0.0
    %1328 = vmatprep.subr.mxu0 0.0
    %1329 = vmatpush1.msra.mxu0 0.0
    %1330 = vmatprep.subr.mxu0 0.0
    %1331 = vmatpush1.msra.mxu0 0.0
    %1332 = vmatprep.subr.mxu0 0.0
    %1333 = vmatpush1.msra.mxu0 0.0
    %1334 = vmatprep.subr.mxu0 0.0
    %1335 = vmatpush1.msra.mxu0 0.0
    %1336 = vmatprep.mubr.f32.mxu0 0.0
    %1337 = vmatmul.mubr.f32.gmra.mrb[0].mxu0 %v1267
    %v1338 = vpop.f32.mrb[0].mxu0
    %v1339 = vadd.f32 0.0, %v1338
    %v1340 = vpop.f32.mrb[0].mxu0
    %1341 = vmatprep.mubr.f32.mxu0 0.0
    %1342 = vmatmul.mubr.f32.gmra.mrb[0].mxu0 %v1270
    %v1343 = vpop.f32.mrb[0].mxu0
    %v1344 = vadd.f32 0.0, %v1343
    %v1345 = vpop.f32.mrb[0].mxu0
    %1346 = vdwg.mxu0
    %v1347 = vadd.f32 %v1064, %v1339
    %v1348 = vadd.f32 %v1065, %v1344
    %v1349 = vlaneseq
    %v1350 = vshrl.u32 %v1349, 7
    %v1351 = vsub.s32 1, %v1350
    %v1352 = vrot.slane %v23, %v1351
    %v1353 = vadd.f32 %v1347, %v1352
    %v1354 = vadd.f32 %v1348, %v1352
    %v1355 = vadd.f32 %v21, %v1353
    %v1356 = vadd.f32 %v22, %v1354
    %v1357 = vsel %vm66, %v1355, 0.0
    %1358 = vadd.xlane.f32.xlu0 %v1357
    %v1359 = vpop.xlane.xlu0 %1358
    %v1360 = vsel %vm66, %v1356, 0.0
    %1361 = vadd.xlane.f32.xlu0 %v1360
    %v1362 = vpop.xlane.xlu0 %1361
    %v1363 = vrcp.pop 32.0
    %v1364 = vmul.f32 %v1359, %v1363
    %v1365 = vmul.f32 %v1362, %v1363
    %v1366 = vmul.f32 %v1355, %v1355
    %v1367 = vmul.f32 %v1356, %v1356
    %v1368 = vsel %vm66, %v1366, 0.0
    %1369 = vadd.xlane.f32.xlu0 %v1368
    %v1370 = vpop.xlane.xlu0 %1369
    %v1371 = vsel %vm66, %v1367, 0.0
    %1372 = vadd.xlane.f32.xlu0 %v1371
    %v1373 = vpop.xlane.xlu0 %1372
    %v1374 = vmul.f32 %v1370, %v1363
    %v1375 = vmul.f32 %v1373, %v1363
    %v1376 = vmul.f32 %v1364, %v1364
    %v1377 = vmul.f32 %v1365, %v1365
    %v1378 = vsub.f32 %v1374, %v1376
    %v1379 = vsub.f32 %v1375, %v1377
    %v1380 = vsub.f32 %v1355, %v1364
    %v1381 = vsub.f32 %v1356, %v1365
    %v1382 = vadd.f32 %v1378, 1e-05
    %v1383 = vadd.f32 %v1379, 1e-05
    %v1384 = vrsqrt.pop %v1382
    %v1385 = vrsqrt.pop %v1383
    %v1386 = vmul.f32 %v1380, %v1384
    %v1387 = vmul.f32 %v1381, %v1385
    %v1388 = vlaneseq
    %v1389 = vshrl.u32 %v1388, 7
    %v1390 = vsub.s32 4, %v1389
    %v1391 = vrot.slane %v23, %v1390
    %v1392 = vmul.f32 %v1386, %v1391
    %v1393 = vmul.f32 %v1387, %v1391
    %v1394 = vlaneseq
    %v1395 = vshrl.u32 %v1394, 7
    %v1396 = vsub.s32 5, %v1395
    %v1397 = vrot.slane %v23, %v1396
    %v1398 = vadd.f32 %v1392, %v1397
    %v1399 = vadd.f32 %v1393, %v1397
    %v1400 = vlaneseq
    %v1401 = vshrl.u32 %v1400, 7
    %v1402 = vsub.s32 2, %v1401
    %v1403 = vrot.slane %v23, %v1402
    %v1405 = vsel %vm66, %v1398, 0
    %v1408 = vsel %vm66, %v1399, 0
    %1410 = vmatprep.subr.mxu0 0.0
    %1411 = vmatpush1.msra.mxu0 %v30
    %1412 = vmatprep.subr.mxu0 0.0
    %1413 = vmatpush1.msra.mxu0 %v31
    %1414 = vmatprep.subr.mxu0 0.0
    %1415 = vmatpush1.msra.mxu0 %v32
    %1416 = vmatprep.subr.mxu0 0.0
    %1417 = vmatpush1.msra.mxu0 %v33
    %1418 = vmatprep.subr.mxu0 0.0
    %1419 = vmatpush1.msra.mxu0 0.0
    %1420 = vmatprep.subr.mxu0 0.0
    %1421 = vmatpush1.msra.mxu0 0.0
    %1422 = vmatprep.subr.mxu0 0.0
    %1423 = vmatpush1.msra.mxu0 0.0
    %1424 = vmatprep.subr.mxu0 0.0
    %1425 = vmatpush1.msra.mxu0 0.0
    %1426 = vmatprep.subr.mxu0 0.0
    %1427 = vmatpush1.msra.mxu0 0.0
    %1428 = vmatprep.subr.mxu0 0.0
    %1429 = vmatpush1.msra.mxu0 0.0
    %1430 = vmatprep.subr.mxu0 0.0
    %1431 = vmatpush1.msra.mxu0 0.0
    %1432 = vmatprep.subr.mxu0 0.0
    %1433 = vmatpush1.msra.mxu0 0.0
    %1434 = vmatprep.subr.mxu0 0.0
    %1435 = vmatpush1.msra.mxu0 0.0
    %1436 = vmatprep.subr.mxu0 0.0
    %1437 = vmatpush1.msra.mxu0 0.0
    %1438 = vmatprep.subr.mxu0 0.0
    %1439 = vmatpush1.msra.mxu0 0.0
    %1440 = vmatprep.subr.mxu0 0.0
    %1441 = vmatpush1.msra.mxu0 0.0
    %1442 = vmatprep.subr.mxu0 0.0
    %1443 = vmatpush1.msra.mxu0 0.0
    %1444 = vmatprep.subr.mxu0 0.0
    %1445 = vmatpush1.msra.mxu0 0.0
    %1446 = vmatprep.subr.mxu0 0.0
    %1447 = vmatpush1.msra.mxu0 0.0
    %1448 = vmatprep.subr.mxu0 0.0
    %1449 = vmatpush1.msra.mxu0 0.0
    %1450 = vmatprep.subr.mxu0 0.0
    %1451 = vmatpush1.msra.mxu0 0.0
    %1452 = vmatprep.subr.mxu0 0.0
    %1453 = vmatpush1.msra.mxu0 0.0
    %1454 = vmatprep.subr.mxu0 0.0
    %1455 = vmatpush1.msra.mxu0 0.0
    %1456 = vmatprep.subr.mxu0 0.0
    %1457 = vmatpush1.msra.mxu0 0.0
    %1458 = vmatprep.subr.mxu0 0.0
    %1459 = vmatpush1.msra.mxu0 0.0
    %1460 = vmatprep.subr.mxu0 0.0
    %1461 = vmatpush1.msra.mxu0 0.0
    %1462 = vmatprep.subr.mxu0 0.0
    %1463 = vmatpush1.msra.mxu0 0.0
    %1464 = vmatprep.subr.mxu0 0.0
    %1465 = vmatpush1.msra.mxu0 0.0
    %1466 = vmatprep.subr.mxu0 0.0
    %1467 = vmatpush1.msra.mxu0 0.0
    %1468 = vmatprep.subr.mxu0 0.0
    %1469 = vmatpush1.msra.mxu0 0.0
    %1470 = vmatprep.subr.mxu0 0.0
    %1471 = vmatpush1.msra.mxu0 0.0
    %1472 = vmatprep.subr.mxu0 0.0
    %1473 = vmatpush1.msra.mxu0 0.0
    %1474 = vmatprep.mubr.f32.mxu0 0.0
    %1475 = vmatmul.mubr.f32.gmra.mrb[0].mxu0 %v1405
    %v1476 = vpop.f32.mrb[0].mxu0
    %v1477 = vadd.f32 %v1403, %v1476
    %v1478 = vpop.f32.mrb[0].mxu0
    %1479 = vmatprep.mubr.f32.mxu0 0.0
    %1480 = vmatmul.mubr.f32.gmra.mrb[0].mxu0 %v1408
    %v1481 = vpop.f32.mrb[0].mxu0
    %v1482 = vadd.f32 %v1403, %v1481
    %v1483 = vpop.f32.mrb[0].mxu0
    %1484 = vdwg.mxu0
    %v1485 = vmax.f32 %v1477, 0.0
    %v1486 = vmax.f32 %v1482, 0.0
    %v1487 = vlaneseq
    %v1488 = vshrl.u32 %v1487, 7
    %v1489 = vsub.s32 3, %v1488
    %v1490 = vrot.slane %v23, %v1489
    %vm1491 = vcmask 523264
    %v1493 = vsel %vm1491, %v1485, 0
    %v1496 = vsel %vm1491, %v1486, 0
    %1498 = vmatprep.subr.mxu0 0.0
    %1499 = vmatpush1.msra.mxu0 %v34
    %1500 = vmatprep.subr.mxu0 0.0
    %1501 = vmatpush1.msra.mxu0 %v35
    %1502 = vmatprep.subr.mxu0 0.0
    %1503 = vmatpush1.msra.mxu0 %v36
    %1504 = vmatprep.subr.mxu0 0.0
    %1505 = vmatpush1.msra.mxu0 %v37
    %1506 = vmatprep.subr.mxu0 0.0
    %1507 = vmatpush1.msra.mxu0 %v38
    %1508 = vmatprep.subr.mxu0 0.0
    %1509 = vmatpush1.msra.mxu0 %v39
    %1510 = vmatprep.subr.mxu0 0.0
    %1511 = vmatpush1.msra.mxu0 %v40
    %1512 = vmatprep.subr.mxu0 0.0
    %1513 = vmatpush1.msra.mxu0 %v41
    %1514 = vmatprep.subr.mxu0 0.0
    %1515 = vmatpush1.msra.mxu0 0.0
    %1516 = vmatprep.subr.mxu0 0.0
    %1517 = vmatpush1.msra.mxu0 0.0
    %1518 = vmatprep.subr.mxu0 0.0
    %1519 = vmatpush1.msra.mxu0 0.0
    %1520 = vmatprep.subr.mxu0 0.0
    %1521 = vmatpush1.msra.mxu0 0.0
    %1522 = vmatprep.subr.mxu0 0.0
    %1523 = vmatpush1.msra.mxu0 0.0
    %1524 = vmatprep.subr.mxu0 0.0
    %1525 = vmatpush1.msra.mxu0 0.0
    %1526 = vmatprep.subr.mxu0 0.0
    %1527 = vmatpush1.msra.mxu0 0.0
    %1528 = vmatprep.subr.mxu0 0.0
    %1529 = vmatpush1.msra.mxu0 0.0
    %1530 = vmatprep.subr.mxu0 0.0
    %1531 = vmatpush1.msra.mxu0 0.0
    %1532 = vmatprep.subr.mxu0 0.0
    %1533 = vmatpush1.msra.mxu0 0.0
    %1534 = vmatprep.subr.mxu0 0.0
    %1535 = vmatpush1.msra.mxu0 0.0
    %1536 = vmatprep.subr.mxu0 0.0
    %1537 = vmatpush1.msra.mxu0 0.0
    %1538 = vmatprep.subr.mxu0 0.0
    %1539 = vmatpush1.msra.mxu0 0.0
    %1540 = vmatprep.subr.mxu0 0.0
    %1541 = vmatpush1.msra.mxu0 0.0
    %1542 = vmatprep.subr.mxu0 0.0
    %1543 = vmatpush1.msra.mxu0 0.0
    %1544 = vmatprep.subr.mxu0 0.0
    %1545 = vmatpush1.msra.mxu0 0.0
    %1546 = vmatprep.subr.mxu0 0.0
    %1547 = vmatpush1.msra.mxu0 0.0
    %1548 = vmatprep.subr.mxu0 0.0
    %1549 = vmatpush1.msra.mxu0 0.0
    %1550 = vmatprep.subr.mxu0 0.0
    %1551 = vmatpush1.msra.mxu0 0.0
    %1552 = vmatprep.subr.mxu0 0.0
    %1553 = vmatpush1.msra.mxu0 0.0
    %1554 = vmatprep.subr.mxu0 0.0
    %1555 = vmatpush1.msra.mxu0 0.0
    %1556 = vmatprep.subr.mxu0 0.0
    %1557 = vmatpush1.msra.mxu0 0.0
    %1558 = vmatprep.subr.mxu0 0.0
    %1559 = vmatpush1.msra.mxu0 0.0
    %1560 = vmatprep.subr.mxu0 0.0
    %1561 = vmatpush1.msra.mxu0 0.0
    %1562 = vmatprep.mubr.f32.mxu0 0.0
    %1563 = vmatmul.mubr.f32.gmra.mrb[0].mxu0 %v1493
    %v1564 = vpop.f32.mrb[0].mxu0
    %v1565 = vadd.f32 %v1490, %v1564
    %v1566 = vpop.f32.mrb[0].mxu0
    %1567 = vmatprep.mubr.f32.mxu0 0.0
    %1568 = vmatmul.mubr.f32.gmra.mrb[0].mxu0 %v1496
    %v1569 = vpop.f32.mrb[0].mxu0
    %v1570 = vadd.f32 %v1490, %v1569
    %v1571 = vpop.f32.mrb[0].mxu0
    %1572 = vdwg.mxu0
    %v1573 = vadd.f32 %v1398, %v1565
    %v1574 = vadd.f32 %v1399, %v1570
    %v1575 = vsel %vm66, %v1573, 0.0
    %1576 = vadd.xlane.f32.xlu0 %v1575
    %v1577 = vpop.xlane.xlu0 %1576
    %v1578 = vsel %vm66, %v1574, 0.0
    %1579 = vadd.xlane.f32.xlu0 %v1578
    %v1580 = vpop.xlane.xlu0 %1579
    %v1581 = vmul.f32 %v1577, %v1363
    %v1582 = vmul.f32 %v1580, %v1363
    %v1583 = vmul.f32 %v1573, %v1573
    %v1584 = vmul.f32 %v1574, %v1574
    %v1585 = vsel %vm66, %v1583, 0.0
    %1586 = vadd.xlane.f32.xlu0 %v1585
    %v1587 = vpop.xlane.xlu0 %1586
    %v1588 = vsel %vm66, %v1584, 0.0
    %1589 = vadd.xlane.f32.xlu0 %v1588
    %v1590 = vpop.xlane.xlu0 %1589
    %v1591 = vmul.f32 %v1587, %v1363
    %v1592 = vmul.f32 %v1590, %v1363
    %v1593 = vmul.f32 %v1581, %v1581
    %v1594 = vmul.f32 %v1582, %v1582
    %v1595 = vsub.f32 %v1591, %v1593
    %v1596 = vsub.f32 %v1592, %v1594
    %v1597 = vsub.f32 %v1573, %v1581
    %v1598 = vsub.f32 %v1574, %v1582
    %v1599 = vadd.f32 %v1595, 1e-05
    %v1600 = vadd.f32 %v1596, 1e-05
    %v1601 = vrsqrt.pop %v1599
    %v1602 = vrsqrt.pop %v1600
    %v1603 = vmul.f32 %v1597, %v1601
    %v1604 = vmul.f32 %v1598, %v1602
    %v1605 = vlaneseq
    %v1606 = vshrl.u32 %v1605, 7
    %v1607 = vsub.s32 6, %v1606
    %v1608 = vrot.slane %v23, %v1607
    %v1609 = vmul.f32 %v1603, %v1608
    %v1610 = vmul.f32 %v1604, %v1608
    %v1611 = vlaneseq
    %v1612 = vshrl.u32 %v1611, 7
    %v1613 = vsub.s32 7, %v1612
    %v1614 = vrot.slane %v23, %v1613
    %v1615 = vadd.f32 %v1609, %v1614
    %v1616 = vadd.f32 %v1610, %v1614
    %1617 = vst.msk [vmem:[#allocation2] sm:$0xff] %vm66, %v1615
    %1618 = vst.msk [vmem:[#allocation2 + $0x8] sm:$0xff] %vm66, %v1616
    // Predicated region
    $region22: #{transformer_encoder_block.1} parent=1 // pred_check
      _
    $region23: #{transformer_encoder_block.1} parent=1 // pred_check_branch
      %1620 = sbr.rel (0) target = $region25
    $region24: #{transformer_encoder_block.1} parent=1 // pred_region
      %s1622 = ssub.s32 256, 256
      %1623 = vsyncadd [#allocation3], %s1622
      %s1624 = sshll.u32 [#allocation2], 4
      %s1625 = int_to_ptr.vmem [resolvable:$true] %s1624
      %1630 = dma.vmem_to_hbm [thread:$0]  %s1625, 256, %s5, [#allocation3], 128, 128, 8
    $region25: #{transformer_encoder_block.1} parent=1 // pred_fallthru
      _
    // Predicated region
    $region26: #{transformer_encoder_block.1} parent=1 // pred_check
      _
    $region27: #{transformer_encoder_block.1} parent=1 // pred_check_branch
      %1632 = sbr.rel (0) target = $region29
    $region28: #{transformer_encoder_block.1} parent=1 // pred_region
      %1633 = dma.done [#allocation3], 256
    $region29: #{transformer_encoder_block.1} parent=1 // pred_fallthru
      _
    %1634 = vsyncpa [#allocation3], 1

</llo_original>
